<compile_context>
chip_gen: v6e
topology: v6e:2x2x1
jax: 0.10.0
libtpu: 0.0.40
codegen_flags: <defaults>
</compile_context>

<pallas_src>
import functools

import jax
import jax.numpy as jnp
from jax.experimental import pallas as pl
from jax.experimental.pallas import tpu as pltpu


# ----------------------------- Pallas kernels -----------------------------

def _linear_kernel(x_ref, w_ref, b_ref, o_ref, *, activation):
    y = jnp.dot(x_ref[...], w_ref[...], preferred_element_type=jnp.float32) + b_ref[...]
    if activation == "tanh":
        y = jnp.tanh(y)
    o_ref[...] = y


def linear(x, w, b, activation=None):
    """x:[M,In] @ w:[In,Out] + b:[1,Out] -> [M,Out] (optionally tanh)."""
    M, In = x.shape
    Out = w.shape[1]
    return pl.pallas_call(
        functools.partial(_linear_kernel, activation=activation),
        out_shape=jax.ShapeDtypeStruct((M, Out), jnp.float32),
        grid=(1,),
        in_specs=[pl.BlockSpec((M, In), lambda i: (0, 0)),
                  pl.BlockSpec((In, Out), lambda i: (0, 0)),
                  pl.BlockSpec((1, Out), lambda i: (0, 0))],
        out_specs=pl.BlockSpec((M, Out), lambda i: (0, 0)),
    )(x, w, b)


def _gru_step(gi, h, whh_ref, bhh_ref, H):
    """One GRU update.  gi:[B,3H] precomputed x-side gates, h:[B,H]."""
    gh = jnp.dot(h, whh_ref[...], preferred_element_type=jnp.float32) + bhh_ref[...]
    r = jax.nn.sigmoid(gi[:, :H] + gh[:, :H])
    z = jax.nn.sigmoid(gi[:, H:2 * H] + gh[:, H:2 * H])
    n = jnp.tanh(gi[:, 2 * H:] + r * gh[:, 2 * H:])
    return (1.0 - z) * n + z * h


def _encoder_kernel(gif_ref, gib_ref, whhf_ref, bhhf_ref, whhb_ref, bhhb_ref,
                    outf_ref, outb_ref, hf_ref, hb_ref, *, H):
    """Fused bidirectional GRU recurrence.  grid=(S,); fwd at time t, bwd at S-1-t."""
    t = pl.program_id(0)

    @pl.when(t == 0)
    def _():
        hf_ref[...] = jnp.zeros_like(hf_ref)
        hb_ref[...] = jnp.zeros_like(hb_ref)

    h_f = _gru_step(gif_ref[0], hf_ref[...], whhf_ref, bhhf_ref, H)
    hf_ref[...] = h_f
    outf_ref[0] = h_f

    h_b = _gru_step(gib_ref[0], hb_ref[...], whhb_ref, bhhb_ref, H)
    hb_ref[...] = h_b
    outb_ref[0] = h_b


def encoder_gru(gi_f, gi_b, whh_f, bhh_f, whh_b, bhh_b, H):
    """gi_*:[S,B,3H] precomputed input gates -> (enc_f, enc_b) each [S,B,H]."""
    S, B, G = gi_f.shape
    grid_spec = pltpu.PrefetchScalarGridSpec(
        num_scalar_prefetch=0,
        grid=(S,),
        in_specs=[
            pl.BlockSpec((1, B, G), lambda t: (t, 0, 0)),
            pl.BlockSpec((1, B, G), lambda t: (S - 1 - t, 0, 0)),
            pl.BlockSpec((H, G), lambda t: (0, 0)),
            pl.BlockSpec((1, G), lambda t: (0, 0)),
            pl.BlockSpec((H, G), lambda t: (0, 0)),
            pl.BlockSpec((1, G), lambda t: (0, 0)),
        ],
        out_specs=(
            pl.BlockSpec((1, B, H), lambda t: (t, 0, 0)),
            pl.BlockSpec((1, B, H), lambda t: (S - 1 - t, 0, 0)),
        ),
        scratch_shapes=[pltpu.VMEM((B, H), jnp.float32),
                        pltpu.VMEM((B, H), jnp.float32)],
    )
    return pl.pallas_call(
        functools.partial(_encoder_kernel, H=H),
        out_shape=(jax.ShapeDtypeStruct((S, B, H), jnp.float32),
                   jax.ShapeDtypeStruct((S, B, H), jnp.float32)),
        grid_spec=grid_spec,
        compiler_params=pltpu.CompilerParams(dimension_semantics=("arbitrary",)),
    )(gi_f, gi_b, whh_f, bhh_f, whh_b, bhh_b)


def _decoder_kernel(emb_ref, h0_ref, enc_ref, ee_ref, mask_ref,
                    wh_ref, v_ref, wih_ref, whh_ref, bih_ref, bhh_ref,
                    fcw_ref, fcb_ref, out_ref, h_ref, *, H, E):
    """Fused decoder step: attention + GRU cell + fc1.  grid=(T-1,)."""
    g = pl.program_id(0)

    @pl.when(g == 0)
    def _():
        h_ref[...] = h0_ref[...]

    h = h_ref[...]                       # [B, H]
    embed = emb_ref[0]                   # [B, E]

    # ---- attention (ee already holds enc @ W_e + b, hoisted out of the loop) ----
    eh = jnp.dot(h, wh_ref[...], preferred_element_type=jnp.float32)      # [B, H]
    energy = jnp.tanh(eh[:, None, :] + ee_ref[...])                       # [B, S, H]
    scores = jnp.sum(energy * v_ref[...][None, :, :], axis=-1)            # [B, S]
    scores = jnp.where(mask_ref[...] == 0.0, jnp.float32(-1e10), scores)
    scores = scores - jnp.max(scores, axis=1, keepdims=True)
    e = jnp.exp(scores)
    attn = e / jnp.sum(e, axis=1, keepdims=True)                          # [B, S]
    weighted = jnp.sum(attn[:, :, None] * enc_ref[...], axis=1)           # [B, 2H]

    # ---- GRU cell, gates packed [., 3H] (r|z|n); input = [embed ; weighted] ----
    gi = (jnp.dot(embed, wih_ref[:E, :], preferred_element_type=jnp.float32)
          + jnp.dot(weighted, wih_ref[E:, :], preferred_element_type=jnp.float32)
          + bih_ref[...])                                                 # [B, 3H]
    gh = jnp.dot(h, whh_ref[...], preferred_element_type=jnp.float32) + bhh_ref[...]
    r = jax.nn.sigmoid(gi[:, :H] + gh[:, :H])
    z = jax.nn.sigmoid(gi[:, H:2 * H] + gh[:, H:2 * H])
    n = jnp.tanh(gi[:, 2 * H:] + r * gh[:, 2 * H:])
    h_new = (1.0 - z) * n + z * h
    h_ref[...] = h_new

    # ---- output projection fc1([h_new ; embed ; weighted]) ----
    logits = (jnp.dot(h_new, fcw_ref[:H, :], preferred_element_type=jnp.float32)
              + jnp.dot(embed, fcw_ref[H:H + E, :], preferred_element_type=jnp.float32)
              + jnp.dot(weighted, fcw_ref[H + E:, :], preferred_element_type=jnp.float32)
              + fcb_ref[...])                                             # [B, dct]
    out_ref[0] = logits


def decoder_run(tgt_emb, h0, enc_bsd, ee, mask, attn_wh, attn_v,
                wih, whh, bih, bhh, fc1_w, fc1_b, *, H, E):
    Tm1, B, _ = tgt_emb.shape
    S = enc_bsd.shape[1]
    dct = fc1_w.shape[1]
    grid_spec = pltpu.PrefetchScalarGridSpec(
        num_scalar_prefetch=0,
        grid=(Tm1,),
        in_specs=[
            pl.BlockSpec((1, B, E), lambda g: (g, 0, 0)),        # target embedding, streamed
            pl.BlockSpec((B, H), lambda g: (0, 0)),              # initial hidden
            pl.BlockSpec((B, S, 2 * H), lambda g: (0, 0, 0)),    # encoder outputs (resident)
            pl.BlockSpec((B, S, H), lambda g: (0, 0, 0)),        # hoisted enc @ W_e + b
            pl.BlockSpec((B, S), lambda g: (0, 0)),              # mask
            pl.BlockSpec((H, H), lambda g: (0, 0)),              # attn W_h
            pl.BlockSpec((1, H), lambda g: (0, 0)),              # attn v
            pl.BlockSpec((E + 2 * H, 3 * H), lambda g: (0, 0)),  # dec W_ih (packed gates)
            pl.BlockSpec((H, 3 * H), lambda g: (0, 0)),          # dec W_hh
            pl.BlockSpec((1, 3 * H), lambda g: (0, 0)),          # dec b_ih
            pl.BlockSpec((1, 3 * H), lambda g: (0, 0)),          # dec b_hh
            pl.BlockSpec((H + E + 2 * H, dct), lambda g: (0, 0)),  # fc1 W
            pl.BlockSpec((1, dct), lambda g: (0, 0)),            # fc1 b
        ],
        out_specs=pl.BlockSpec((1, B, dct), lambda g: (g, 0, 0)),
        scratch_shapes=[pltpu.VMEM((B, H), jnp.float32)],
    )
    return pl.pallas_call(
        functools.partial(_decoder_kernel, H=H, E=E),
        out_shape=jax.ShapeDtypeStruct((Tm1, B, dct), jnp.float32),
        grid_spec=grid_spec,
        compiler_params=pltpu.CompilerParams(dimension_semantics=("arbitrary",)),
    )(tgt_emb, h0, enc_bsd, ee, mask, attn_wh, attn_v,
      wih, whh, bih, bhh, fc1_w, fc1_b)


# ----------------------------- parameters -----------------------------

def init_params(key, dct_size, H, E):
    keys = jax.random.split(key, 32)
    k = iter(keys)

    def u(shape, scale=0.1):
        return (jax.random.uniform(next(k), shape, jnp.float32) - 0.5) * 2.0 * scale

    def gru_params(in_size):
        # gates packed along the last dim, order (r | z | n)
        return (u((in_size, 3 * H)), u((H, 3 * H)), u((1, 3 * H)), u((1, 3 * H)))

    p = {}
    p["embed"] = u((dct_size, E))
    # Encoder bidirectional GRU (1 layer): forward + reverse directions.
    p["enc_f"] = gru_params(E)
    p["enc_b"] = gru_params(E)
    # Encoder fc: Linear(2H, H)
    p["enc_fc_w"], p["enc_fc_b"] = u((2 * H, H)), u((1, H))
    # Attention: Linear(2H + H, H) split into hidden-part / enc-part; v: Linear(H,1,no bias)
    p["attn_wh"], p["attn_we"] = u((H, H)), u((2 * H, H))
    p["attn_b"], p["attn_v"] = u((1, H)), u((1, H))
    # Decoder GRU: input size E + 2H
    p["dec"] = gru_params(E + 2 * H)
    # Decoder fc1: Linear(H + E + 2H, dct_size)
    p["fc1_w"], p["fc1_b"] = u((H + E + 2 * H, dct_size)), u((1, dct_size))
    return p


# ----------------------------- forward pass -----------------------------

def seq2seq_forward(params, src, target, H, E, dct_size):
    """src:[batch, src_len] int32, target:[batch, tgt_len] int32."""
    src_t = src.T        # [S, B]
    tgt_t = target.T     # [T, B]
    S, B = src_t.shape
    T = tgt_t.shape[0]

    # ---------------- Encoder ----------------
    embedded = params["embed"][src_t]                    # [S, B, E] (dropout -> identity)
    wih_f, whh_f, bih_f, bhh_f = params["enc_f"]
    wih_b, whh_b, bih_b, bhh_b = params["enc_b"]

    # Batch the input-side gate projections over all timesteps (one big matmul each).
    emb_flat = embedded.reshape(S * B, E)
    gi_f = linear(emb_flat, wih_f, bih_f).reshape(S, B, 3 * H)
    gi_b = linear(emb_flat, wih_b, bih_b).reshape(S, B, 3 * H)

    # Fused bidirectional recurrence (single pallas_call, grid=(S,)).
    enc_f, enc_b = encoder_gru(gi_f, gi_b, whh_f, bhh_f, whh_b, bhh_b, H)

    # Decoder initial hidden: tanh(fc([h_fwd_final ; h_bwd_final])).
    hid_cat = jnp.concatenate([enc_f[S - 1], enc_b[0]], axis=1)          # [B, 2H]
    hidden0 = linear(hid_cat, params["enc_fc_w"], params["enc_fc_b"],
                     activation="tanh")                                  # [B, H]

    enc_bsd = jnp.transpose(jnp.concatenate([enc_f, enc_b], axis=-1),
                            (1, 0, 2))                                   # [B, S, 2H]

    # Hoisted loop-invariant attention projection: enc @ W_e + b.
    ee = linear(enc_bsd.reshape(B * S, 2 * H),
                params["attn_we"], params["attn_b"]).reshape(B, S, H)

    # mask: ((src != 0) & (src != 3)).T  -> [B, S]
    mask = ((src_t != 0) & (src_t != 3)).T.astype(jnp.float32)

    # ---------------- Decoder (fused, grid=(T-1,)) ----------------
    # TODO(synk): nondeterministic teacher forcing -> always use ground truth.
    tgt_emb = params["embed"][tgt_t[:T - 1]]             # [T-1, B, E] (dropout -> identity)
    wih_d, whh_d, bih_d, bhh_d = params["dec"]
    logits = decoder_run(tgt_emb, hidden0, enc_bsd, ee, mask,
                         params["attn_wh"], params["attn_v"],
                         wih_d, whh_d, bih_d, bhh_d,
                         params["fc1_w"], params["fc1_b"], H=H, E=E)     # [T-1, B, dct]

    outputs_main = jnp.transpose(logits, (1, 0, 2))                      # [B, T-1, dct]
    # torch fills outputs[:, i-1] for i in 1..T-1; slot T-1 stays zero.
    outputs = jnp.concatenate(
        [outputs_main, jnp.zeros((B, 1, dct_size), jnp.float32)], axis=1)  # [B, T, dct]
    preds_main = jnp.argmax(outputs_main, axis=-1).astype(jnp.float32)   # [B, T-1]
    preds = jnp.concatenate([preds_main, jnp.zeros((B, 1), jnp.float32)], axis=1)
    return outputs, preds


# ----------------------------- main -----------------------------

if __name__ == "__main__":
    dct_size, hidden_size, embed_size = 50, 32, 16
    batch, src_len, tgt_len = 2, 8, 6

    key = jax.random.PRNGKey(0)
    pkey, skey, tkey = jax.random.split(key, 3)
    params = init_params(pkey, dct_size, hidden_size, embed_size)
    src = jax.random.randint(skey, (batch, src_len), 0, dct_size, dtype=jnp.int32)
    target = jax.random.randint(tkey, (batch, tgt_len), 0, dct_size, dtype=jnp.int32)

    fwd = jax.jit(lambda p, s, t: seq2seq_forward(p, s, t,
                                                  hidden_size, embed_size, dct_size))
    outputs, preds = fwd(params, src, target)
    jax.block_until_ready((outputs, preds))
    assert outputs.shape == (batch, tgt_len, dct_size)
    assert preds.shape == (batch, tgt_len)
    assert bool(jnp.all(jnp.isfinite(outputs)))
    print("KERNEL_OK")
</pallas_src>

<mosaic_0001>
module attributes {stable_mosaic.version = 11 : i64} {
  func.func @_linear_kernel(%arg0: i32, %arg1: memref<16x16xf32, #tpu.memory_space<vmem>>, %arg2: memref<16x96xf32, #tpu.memory_space<vmem>>, %arg3: memref<1x96xf32, #tpu.memory_space<vmem>>, %arg4: memref<16x96xf32, #tpu.memory_space<vmem>>) attributes {dimension_semantics = [#tpu.dimension_semantics<arbitrary>], iteration_bounds = array<i64: 1>, scalar_prefetch = 0 : i64, scratch_operands = 0 : i64, tpu.core_type = #tpu.core_type<tc>, window_params = [{pipeline_mode = #tpu.pipeline_mode<synchronous>, transform_indices = @transform_0, window_bounds = array<i64: 16, 16>}, {pipeline_mode = #tpu.pipeline_mode<synchronous>, transform_indices = @transform_1, window_bounds = array<i64: 16, 96>}, {pipeline_mode = #tpu.pipeline_mode<synchronous>, transform_indices = @transform_2, window_bounds = array<i64: 1, 96>}, {pipeline_mode = #tpu.pipeline_mode<synchronous>, transform_indices = @transform_3, window_bounds = array<i64: 16, 96>}]} {
    %c0 = arith.constant 0 : index
    %c0_0 = arith.constant 0 : index
    %0 = vector.load %arg1[%c0, %c0_0] : memref<16x16xf32, #tpu.memory_space<vmem>>, vector<16x16xf32>
    %c0_1 = arith.constant 0 : index
    %c0_2 = arith.constant 0 : index
    %1 = vector.load %arg2[%c0_1, %c0_2] : memref<16x96xf32, #tpu.memory_space<vmem>>, vector<16x96xf32>
    %cst = arith.constant dense<0.000000e+00> : vector<16x96xf32>
    %2 = tpu.matmul %0, %1, %cst {dimension_numbers = #tpu.dot_dimension_numbers<[1], [0], [0], [1], [0, 0, 1, 1], [], []>} : vector<16x16xf32>, vector<16x96xf32>, vector<16x96xf32> -> vector<16x96xf32>
    %c0_3 = arith.constant 0 : index
    %c0_4 = arith.constant 0 : index
    %3 = vector.load %arg3[%c0_3, %c0_4] : memref<1x96xf32, #tpu.memory_space<vmem>>, vector<1x96xf32>
    %4 = vector.broadcast %3 : vector<1x96xf32> to vector<16x96xf32>
    %5 = arith.addf %2, %4 : vector<16x96xf32>
    %c0_5 = arith.constant 0 : index
    %c0_6 = arith.constant 0 : index
    %6 = vector.load %arg4[%c0_5, %c0_6] : memref<16x96xf32, #tpu.memory_space<vmem>>, vector<16x96xf32>
    tpu.vector_store %arg4[%c0_5, %c0_6], %5 {strides = array<i32>} : memref<16x96xf32, #tpu.memory_space<vmem>>, vector<16x96xf32>,
    return
  }
  func.func @transform_0(%arg0: i32) -> (i32, i32) {
    %c0_i32 = arith.constant 0 : i32
    %c0_i32_0 = arith.constant 0 : i32
    %c0_i32_1 = arith.constant 0 : i32
    return %c0_i32, %c0_i32_0 : i32, i32
  }
  func.func @transform_1(%arg0: i32) -> (i32, i32) {
    %c0_i32 = arith.constant 0 : i32
    %c0_i32_0 = arith.constant 0 : i32
    %c0_i32_1 = arith.constant 0 : i32
    return %c0_i32, %c0_i32_0 : i32, i32
  }
  func.func @transform_2(%arg0: i32) -> (i32, i32) {
    %c0_i32 = arith.constant 0 : i32
    %c0_i32_0 = arith.constant 0 : i32
    %c0_i32_1 = arith.constant 0 : i32
    return %c0_i32, %c0_i32_0 : i32, i32
  }
  func.func @transform_3(%arg0: i32) -> (i32, i32) {
    %c0_i32 = arith.constant 0 : i32
    %c0_i32_0 = arith.constant 0 : i32
    %c0_i32_1 = arith.constant 0 : i32
    return %c0_i32, %c0_i32_0 : i32, i32
  }
}

module attributes {stable_mosaic.version = 11 : i64} {
  func.func @_encoder_kernel(%arg0: i32, %arg1: memref<1x2x96xf32, #tpu.memory_space<vmem>>, %arg2: memref<1x2x96xf32, #tpu.memory_space<vmem>>, %arg3: memref<32x96xf32, #tpu.memory_space<vmem>>, %arg4: memref<1x96xf32, #tpu.memory_space<vmem>>, %arg5: memref<32x96xf32, #tpu.memory_space<vmem>>, %arg6: memref<1x96xf32, #tpu.memory_space<vmem>>, %arg7: memref<1x2x32xf32, #tpu.memory_space<vmem>>, %arg8: memref<1x2x32xf32, #tpu.memory_space<vmem>>, %arg9: memref<2x32xf32, #tpu.memory_space<vmem>>, %arg10: memref<2x32xf32, #tpu.memory_space<vmem>>) attributes {dimension_semantics = [#tpu.dimension_semantics<arbitrary>], iteration_bounds = array<i64: 8>, scalar_prefetch = 0 : i64, scratch_operands = 2 : i64, tpu.core_type = #tpu.core_type<tc>, window_params = [{transform_indices = @transform_0, window_bounds = array<i64: 1, 2, 96>}, {transform_indices = @transform_1, window_bounds = array<i64: 1, 2, 96>}, {pipeline_mode = #tpu.pipeline_mode<synchronous>, transform_indices = @transform_2, window_bounds = array<i64: 32, 96>}, {pipeline_mode = #tpu.pipeline_mode<synchronous>, transform_indices = @transform_3, window_bounds = array<i64: 1, 96>}, {pipeline_mode = #tpu.pipeline_mode<synchronous>, transform_indices = @transform_4, window_bounds = array<i64: 32, 96>}, {pipeline_mode = #tpu.pipeline_mode<synchronous>, transform_indices = @transform_5, window_bounds = array<i64: 1, 96>}, {transform_indices = @transform_6, window_bounds = array<i64: 1, 2, 32>}, {transform_indices = @transform_7, window_bounds = array<i64: 1, 2, 32>}]} {
    %c0_i32 = arith.constant 0 : i32
    %0 = arith.cmpi eq, %arg0, %c0_i32 : i32
    %1 = arith.extui %0 : i1 to i32
    %c0_i32_0 = arith.constant 0 : i32
    %2 = arith.cmpi ne, %1, %c0_i32_0 : i32
    scf.if %2 {
      %cst_35 = arith.constant 0.000000e+00 : f32
      %79 = vector.broadcast %cst_35 : f32 to vector<2x32xf32>
      %c0_36 = arith.constant 0 : index
      %c0_37 = arith.constant 0 : index
      %80 = vector.load %arg9[%c0_36, %c0_37] : memref<2x32xf32, #tpu.memory_space<vmem>>, vector<2x32xf32>
      tpu.vector_store %arg9[%c0_36, %c0_37], %79 {strides = array<i32>} : memref<2x32xf32, #tpu.memory_space<vmem>>, vector<2x32xf32>,
      %cst_38 = arith.constant 0.000000e+00 : f32
      %81 = vector.broadcast %cst_38 : f32 to vector<2x32xf32>
      %c0_39 = arith.constant 0 : index
      %c0_40 = arith.constant 0 : index
      %82 = vector.load %arg10[%c0_39, %c0_40] : memref<2x32xf32, #tpu.memory_space<vmem>>, vector<2x32xf32>
      tpu.vector_store %arg10[%c0_39, %c0_40], %81 {strides = array<i32>} : memref<2x32xf32, #tpu.memory_space<vmem>>, vector<2x32xf32>,
    } else {
    }
    %c0 = arith.constant 0 : index
    %c0_1 = arith.constant 0 : index
    %c0_2 = arith.constant 0 : index
    %3 = vector.load %arg1[%c0, %c0_1, %c0_2] : memref<1x2x96xf32, #tpu.memory_space<vmem>>, vector<1x2x96xf32>
    %4 = vector.shape_cast %3 : vector<1x2x96xf32> to vector<2x96xf32>
    %c0_3 = arith.constant 0 : index
    %c0_4 = arith.constant 0 : index
    %5 = vector.load %arg9[%c0_3, %c0_4] : memref<2x32xf32, #tpu.memory_space<vmem>>, vector<2x32xf32>
    %c0_5 = arith.constant 0 : index
    %c0_6 = arith.constant 0 : index
    %6 = vector.load %arg3[%c0_5, %c0_6] : memref<32x96xf32, #tpu.memory_space<vmem>>, vector<32x96xf32>
    %cst = arith.constant dense<0.000000e+00> : vector<2x96xf32>
    %7 = tpu.matmul %5, %6, %cst {dimension_numbers = #tpu.dot_dimension_numbers<[1], [0], [0], [1], [0, 0, 1, 1], [], []>} : vector<2x32xf32>, vector<32x96xf32>, vector<2x96xf32> -> vector<2x96xf32>
    %c0_7 = arith.constant 0 : index
    %c0_8 = arith.constant 0 : index
    %8 = vector.load %arg4[%c0_7, %c0_8] : memref<1x96xf32, #tpu.memory_space<vmem>>, vector<1x96xf32>
    %9 = vector.broadcast %8 : vector<1x96xf32> to vector<2x96xf32>
    %10 = arith.addf %7, %9 : vector<2x96xf32>
    %11 = vector.extract_strided_slice %4 {offsets = [0, 0], sizes = [2, 32], strides = [1, 1]} : vector<2x96xf32> to vector<2x32xf32>
    %12 = vector.extract_strided_slice %10 {offsets = [0, 0], sizes = [2, 32], strides = [1, 1]} : vector<2x96xf32> to vector<2x32xf32>
    %13 = arith.addf %11, %12 : vector<2x32xf32>
    %14 = arith.negf %13 : vector<2x32xf32>
    %15 = math.exp %14 : vector<2x32xf32>
    %cst_9 = arith.constant 1.000000e+00 : f32
    %16 = vector.broadcast %cst_9 : f32 to vector<2x32xf32>
    %17 = arith.addf %16, %15 : vector<2x32xf32>
    %18 = arith.divf %16, %17 : vector<2x32xf32>
    %19 = vector.extract_strided_slice %4 {offsets = [0, 32], sizes = [2, 32], strides = [1, 1]} : vector<2x96xf32> to vector<2x32xf32>
    %20 = vector.extract_strided_slice %10 {offsets = [0, 32], sizes = [2, 32], strides = [1, 1]} : vector<2x96xf32> to vector<2x32xf32>
    %21 = arith.addf %19, %20 : vector<2x32xf32>
    %22 = arith.negf %21 : vector<2x32xf32>
    %23 = math.exp %22 : vector<2x32xf32>
    %cst_10 = arith.constant 1.000000e+00 : f32
    %24 = vector.broadcast %cst_10 : f32 to vector<2x32xf32>
    %25 = arith.addf %24, %23 : vector<2x32xf32>
    %26 = arith.divf %24, %25 : vector<2x32xf32>
    %27 = vector.extract_strided_slice %4 {offsets = [0, 64], sizes = [2, 32], strides = [1, 1]} : vector<2x96xf32> to vector<2x32xf32>
    %28 = vector.extract_strided_slice %10 {offsets = [0, 64], sizes = [2, 32], strides = [1, 1]} : vector<2x96xf32> to vector<2x32xf32>
    %29 = arith.mulf %18, %28 : vector<2x32xf32>
    %30 = arith.addf %27, %29 : vector<2x32xf32>
    %31 = math.tanh %30 : vector<2x32xf32>
    %cst_11 = arith.constant 1.000000e+00 : f32
    %32 = vector.broadcast %cst_11 : f32 to vector<2x32xf32>
    %33 = arith.subf %32, %26 : vector<2x32xf32>
    %34 = arith.mulf %33, %31 : vector<2x32xf32>
    %35 = arith.mulf %26, %5 : vector<2x32xf32>
    %36 = arith.addf %34, %35 : vector<2x32xf32>
    %c0_12 = arith.constant 0 : index
    %c0_13 = arith.constant 0 : index
    %37 = vector.load %arg9[%c0_12, %c0_13] : memref<2x32xf32, #tpu.memory_space<vmem>>, vector<2x32xf32>
    tpu.vector_store %arg9[%c0_12, %c0_13], %36 {strides = array<i32>} : memref<2x32xf32, #tpu.memory_space<vmem>>, vector<2x32xf32>,
    %c0_14 = arith.constant 0 : index
    %c0_15 = arith.constant 0 : index
    %c0_16 = arith.constant 0 : index
    %38 = vector.load %arg7[%c0_14, %c0_15, %c0_16] : memref<1x2x32xf32, #tpu.memory_space<vmem>>, vector<1x2x32xf32>
    %39 = vector.shape_cast %38 : vector<1x2x32xf32> to vector<2x32xf32>
    %40 = vector.shape_cast %36 : vector<2x32xf32> to vector<1x2x32xf32>
    tpu.vector_store %arg7[%c0_14, %c0_15, %c0_16], %40 {strides = array<i32>} : memref<1x2x32xf32, #tpu.memory_space<vmem>>, vector<1x2x32xf32>,
    %c0_17 = arith.constant 0 : index
    %c0_18 = arith.constant 0 : index
    %c0_19 = arith.constant 0 : index
    %41 = vector.load %arg2[%c0_17, %c0_18, %c0_19] : memref<1x2x96xf32, #tpu.memory_space<vmem>>, vector<1x2x96xf32>
    %42 = vector.shape_cast %41 : vector<1x2x96xf32> to vector<2x96xf32>
    %c0_20 = arith.constant 0 : index
    %c0_21 = arith.constant 0 : index
    %43 = vector.load %arg10[%c0_20, %c0_21] : memref<2x32xf32, #tpu.memory_space<vmem>>, vector<2x32xf32>
    %c0_22 = arith.constant 0 : index
    %c0_23 = arith.constant 0 : index
    %44 = vector.load %arg5[%c0_22, %c0_23] : memref<32x96xf32, #tpu.memory_space<vmem>>, vector<32x96xf32>
    %cst_24 = arith.constant dense<0.000000e+00> : vector<2x96xf32>
    %45 = tpu.matmul %43, %44, %cst_24 {dimension_numbers = #tpu.dot_dimension_numbers<[1], [0], [0], [1], [0, 0, 1, 1], [], []>} : vector<2x32xf32>, vector<32x96xf32>, vector<2x96xf32> -> vector<2x96xf32>
    %c0_25 = arith.constant 0 : index
    %c0_26 = arith.constant 0 : index
    %46 = vector.load %arg6[%c0_25, %c0_26] : memref<1x96xf32, #tpu.memory_space<vmem>>, vector<1x96xf32>
    %47 = vector.broadcast %46 : vector<1x96xf32> to vector<2x96xf32>
    %48 = arith.addf %45, %47 : vector<2x96xf32>
    %49 = vector.extract_strided_slice %42 {offsets = [0, 0], sizes = [2, 32], strides = [1, 1]} : vector<2x96xf32> to vector<2x32xf32>
    %50 = vector.extract_strided_slice %48 {offsets = [0, 0], sizes = [2, 32], strides = [1, 1]} : vector<2x96xf32> to vector<2x32xf32>
    %51 = arith.addf %49, %50 : vector<2x32xf32>
    %52 = arith.negf %51 : vector<2x32xf32>
    %53 = math.exp %52 : vector<2x32xf32>
    %cst_27 = arith.constant 1.000000e+00 : f32
    %54 = vector.broadcast %cst_27 : f32 to vector<2x32xf32>
    %55 = arith.addf %54, %53 : vector<2x32xf32>
    %56 = arith.divf %54, %55 : vector<2x32xf32>
    %57 = vector.extract_strided_slice %42 {offsets = [0, 32], sizes = [2, 32], strides = [1, 1]} : vector<2x96xf32> to vector<2x32xf32>
    %58 = vector.extract_strided_slice %48 {offsets = [0, 32], sizes = [2, 32], strides = [1, 1]} : vector<2x96xf32> to vector<2x32xf32>
    %59 = arith.addf %57, %58 : vector<2x32xf32>
    %60 = arith.negf %59 : vector<2x32xf32>
    %61 = math.exp %60 : vector<2x32xf32>
    %cst_28 = arith.constant 1.000000e+00 : f32
    %62 = vector.broadcast %cst_28 : f32 to vector<2x32xf32>
    %63 = arith.addf %62, %61 : vector<2x32xf32>
    %64 = arith.divf %62, %63 : vector<2x32xf32>
    %65 = vector.extract_strided_slice %42 {offsets = [0, 64], sizes = [2, 32], strides = [1, 1]} : vector<2x96xf32> to vector<2x32xf32>
    %66 = vector.extract_strided_slice %48 {offsets = [0, 64], sizes = [2, 32], strides = [1, 1]} : vector<2x96xf32> to vector<2x32xf32>
    %67 = arith.mulf %56, %66 : vector<2x32xf32>
    %68 = arith.addf %65, %67 : vector<2x32xf32>
    %69 = math.tanh %68 : vector<2x32xf32>
    %cst_29 = arith.constant 1.000000e+00 : f32
    %70 = vector.broadcast %cst_29 : f32 to vector<2x32xf32>
    %71 = arith.subf %70, %64 : vector<2x32xf32>
    %72 = arith.mulf %71, %69 : vector<2x32xf32>
    %73 = arith.mulf %64, %43 : vector<2x32xf32>
    %74 = arith.addf %72, %73 : vector<2x32xf32>
    %c0_30 = arith.constant 0 : index
    %c0_31 = arith.constant 0 : index
    %75 = vector.load %arg10[%c0_30, %c0_31] : memref<2x32xf32, #tpu.memory_space<vmem>>, vector<2x32xf32>
    tpu.vector_store %arg10[%c0_30, %c0_31], %74 {strides = array<i32>} : memref<2x32xf32, #tpu.memory_space<vmem>>, vector<2x32xf32>,
    %c0_32 = arith.constant 0 : index
    %c0_33 = arith.constant 0 : index
    %c0_34 = arith.constant 0 : index
    %76 = vector.load %arg8[%c0_32, %c0_33, %c0_34] : memref<1x2x32xf32, #tpu.memory_space<vmem>>, vector<1x2x32xf32>
    %77 = vector.shape_cast %76 : vector<1x2x32xf32> to vector<2x32xf32>
    %78 = vector.shape_cast %74 : vector<2x32xf32> to vector<1x2x32xf32>
    tpu.vector_store %arg8[%c0_32, %c0_33, %c0_34], %78 {strides = array<i32>} : memref<1x2x32xf32, #tpu.memory_space<vmem>>, vector<1x2x32xf32>,
    return
  }
  func.func @transform_0(%arg0: i32) -> (i32, i32, i32) {
    %c0_i32 = arith.constant 0 : i32
    %c0_i32_0 = arith.constant 0 : i32
    %c0_i32_1 = arith.constant 0 : i32
    return %arg0, %c0_i32, %c0_i32_0 : i32, i32, i32
  }
  func.func @transform_1(%arg0: i32) -> (i32, i32, i32) {
    %c7_i32 = arith.constant 7 : i32
    %0 = arith.subi %c7_i32, %arg0 : i32
    %c0_i32 = arith.constant 0 : i32
    %c0_i32_0 = arith.constant 0 : i32
    %c0_i32_1 = arith.constant 0 : i32
    return %0, %c0_i32, %c0_i32_0 : i32, i32, i32
  }
  func.func @transform_2(%arg0: i32) -> (i32, i32) {
    %c0_i32 = arith.constant 0 : i32
    %c0_i32_0 = arith.constant 0 : i32
    %c0_i32_1 = arith.constant 0 : i32
    return %c0_i32, %c0_i32_0 : i32, i32
  }
  func.func @transform_3(%arg0: i32) -> (i32, i32) {
    %c0_i32 = arith.constant 0 : i32
    %c0_i32_0 = arith.constant 0 : i32
    %c0_i32_1 = arith.constant 0 : i32
    return %c0_i32, %c0_i32_0 : i32, i32
  }
  func.func @transform_4(%arg0: i32) -> (i32, i32) {
    %c0_i32 = arith.constant 0 : i32
    %c0_i32_0 = arith.constant 0 : i32
    %c0_i32_1 = arith.constant 0 : i32
    return %c0_i32, %c0_i32_0 : i32, i32
  }
  func.func @transform_5(%arg0: i32) -> (i32, i32) {
    %c0_i32 = arith.constant 0 : i32
    %c0_i32_0 = arith.constant 0 : i32
    %c0_i32_1 = arith.constant 0 : i32
    return %c0_i32, %c0_i32_0 : i32, i32
  }
  func.func @transform_6(%arg0: i32) -> (i32, i32, i32) {
    %c0_i32 = arith.constant 0 : i32
    %c0_i32_0 = arith.constant 0 : i32
    %c0_i32_1 = arith.constant 0 : i32
    return %arg0, %c0_i32, %c0_i32_0 : i32, i32, i32
  }
  func.func @transform_7(%arg0: i32) -> (i32, i32, i32) {
    %c7_i32 = arith.constant 7 : i32
    %0 = arith.subi %c7_i32, %arg0 : i32
    %c0_i32 = arith.constant 0 : i32
    %c0_i32_0 = arith.constant 0 : i32
    %c0_i32_1 = arith.constant 0 : i32
    return %0, %c0_i32, %c0_i32_0 : i32, i32, i32
  }
}

module attributes {stable_mosaic.version = 11 : i64} {
  func.func @_linear_kernel(%arg0: i32, %arg1: memref<16x64xf32, #tpu.memory_space<vmem>>, %arg2: memref<64x32xf32, #tpu.memory_space<vmem>>, %arg3: memref<1x32xf32, #tpu.memory_space<vmem>>, %arg4: memref<16x32xf32, #tpu.memory_space<vmem>>) attributes {dimension_semantics = [#tpu.dimension_semantics<arbitrary>], iteration_bounds = array<i64: 1>, scalar_prefetch = 0 : i64, scratch_operands = 0 : i64, tpu.core_type = #tpu.core_type<tc>, window_params = [{pipeline_mode = #tpu.pipeline_mode<synchronous>, transform_indices = @transform_0, window_bounds = array<i64: 16, 64>}, {pipeline_mode = #tpu.pipeline_mode<synchronous>, transform_indices = @transform_1, window_bounds = array<i64: 64, 32>}, {pipeline_mode = #tpu.pipeline_mode<synchronous>, transform_indices = @transform_2, window_bounds = array<i64: 1, 32>}, {pipeline_mode = #tpu.pipeline_mode<synchronous>, transform_indices = @transform_3, window_bounds = array<i64: 16, 32>}]} {
    %c0 = arith.constant 0 : index
    %c0_0 = arith.constant 0 : index
    %0 = vector.load %arg1[%c0, %c0_0] : memref<16x64xf32, #tpu.memory_space<vmem>>, vector<16x64xf32>
    %c0_1 = arith.constant 0 : index
    %c0_2 = arith.constant 0 : index
    %1 = vector.load %arg2[%c0_1, %c0_2] : memref<64x32xf32, #tpu.memory_space<vmem>>, vector<64x32xf32>
    %cst = arith.constant dense<0.000000e+00> : vector<16x32xf32>
    %2 = tpu.matmul %0, %1, %cst {dimension_numbers = #tpu.dot_dimension_numbers<[1], [0], [0], [1], [0, 0, 1, 1], [], []>} : vector<16x64xf32>, vector<64x32xf32>, vector<16x32xf32> -> vector<16x32xf32>
    %c0_3 = arith.constant 0 : index
    %c0_4 = arith.constant 0 : index
    %3 = vector.load %arg3[%c0_3, %c0_4] : memref<1x32xf32, #tpu.memory_space<vmem>>, vector<1x32xf32>
    %4 = vector.broadcast %3 : vector<1x32xf32> to vector<16x32xf32>
    %5 = arith.addf %2, %4 : vector<16x32xf32>
    %c0_5 = arith.constant 0 : index
    %c0_6 = arith.constant 0 : index
    %6 = vector.load %arg4[%c0_5, %c0_6] : memref<16x32xf32, #tpu.memory_space<vmem>>, vector<16x32xf32>
    tpu.vector_store %arg4[%c0_5, %c0_6], %5 {strides = array<i32>} : memref<16x32xf32, #tpu.memory_space<vmem>>, vector<16x32xf32>,
    return
  }
  func.func @transform_0(%arg0: i32) -> (i32, i32) {
    %c0_i32 = arith.constant 0 : i32
    %c0_i32_0 = arith.constant 0 : i32
    %c0_i32_1 = arith.constant 0 : i32
    return %c0_i32, %c0_i32_0 : i32, i32
  }
  func.func @transform_1(%arg0: i32) -> (i32, i32) {
    %c0_i32 = arith.constant 0 : i32
    %c0_i32_0 = arith.constant 0 : i32
    %c0_i32_1 = arith.constant 0 : i32
    return %c0_i32, %c0_i32_0 : i32, i32
  }
  func.func @transform_2(%arg0: i32) -> (i32, i32) {
    %c0_i32 = arith.constant 0 : i32
    %c0_i32_0 = arith.constant 0 : i32
    %c0_i32_1 = arith.constant 0 : i32
    return %c0_i32, %c0_i32_0 : i32, i32
  }
  func.func @transform_3(%arg0: i32) -> (i32, i32) {
    %c0_i32 = arith.constant 0 : i32
    %c0_i32_0 = arith.constant 0 : i32
    %c0_i32_1 = arith.constant 0 : i32
    return %c0_i32, %c0_i32_0 : i32, i32
  }
}

module attributes {stable_mosaic.version = 11 : i64} {
  func.func @_linear_kernel(%arg0: i32, %arg1: memref<2x64xf32, #tpu.memory_space<vmem>>, %arg2: memref<64x32xf32, #tpu.memory_space<vmem>>, %arg3: memref<1x32xf32, #tpu.memory_space<vmem>>, %arg4: memref<2x32xf32, #tpu.memory_space<vmem>>) attributes {dimension_semantics = [#tpu.dimension_semantics<arbitrary>], iteration_bounds = array<i64: 1>, scalar_prefetch = 0 : i64, scratch_operands = 0 : i64, tpu.core_type = #tpu.core_type<tc>, window_params = [{pipeline_mode = #tpu.pipeline_mode<synchronous>, transform_indices = @transform_0, window_bounds = array<i64: 2, 64>}, {pipeline_mode = #tpu.pipeline_mode<synchronous>, transform_indices = @transform_1, window_bounds = array<i64: 64, 32>}, {pipeline_mode = #tpu.pipeline_mode<synchronous>, transform_indices = @transform_2, window_bounds = array<i64: 1, 32>}, {pipeline_mode = #tpu.pipeline_mode<synchronous>, transform_indices = @transform_3, window_bounds = array<i64: 2, 32>}]} {
    %c0 = arith.constant 0 : index
    %c0_0 = arith.constant 0 : index
    %0 = vector.load %arg1[%c0, %c0_0] : memref<2x64xf32, #tpu.memory_space<vmem>>, vector<2x64xf32>
    %c0_1 = arith.constant 0 : index
    %c0_2 = arith.constant 0 : index
    %1 = vector.load %arg2[%c0_1, %c0_2] : memref<64x32xf32, #tpu.memory_space<vmem>>, vector<64x32xf32>
    %cst = arith.constant dense<0.000000e+00> : vector<2x32xf32>
    %2 = tpu.matmul %0, %1, %cst {dimension_numbers = #tpu.dot_dimension_numbers<[1], [0], [0], [1], [0, 0, 1, 1], [], []>} : vector<2x64xf32>, vector<64x32xf32>, vector<2x32xf32> -> vector<2x32xf32>
    %c0_3 = arith.constant 0 : index
    %c0_4 = arith.constant 0 : index
    %3 = vector.load %arg3[%c0_3, %c0_4] : memref<1x32xf32, #tpu.memory_space<vmem>>, vector<1x32xf32>
    %4 = vector.broadcast %3 : vector<1x32xf32> to vector<2x32xf32>
    %5 = arith.addf %2, %4 : vector<2x32xf32>
    %6 = math.tanh %5 : vector<2x32xf32>
    %c0_5 = arith.constant 0 : index
    %c0_6 = arith.constant 0 : index
    %7 = vector.load %arg4[%c0_5, %c0_6] : memref<2x32xf32, #tpu.memory_space<vmem>>, vector<2x32xf32>
    tpu.vector_store %arg4[%c0_5, %c0_6], %6 {strides = array<i32>} : memref<2x32xf32, #tpu.memory_space<vmem>>, vector<2x32xf32>,
    return
  }
  func.func @transform_0(%arg0: i32) -> (i32, i32) {
    %c0_i32 = arith.constant 0 : i32
    %c0_i32_0 = arith.constant 0 : i32
    %c0_i32_1 = arith.constant 0 : i32
    return %c0_i32, %c0_i32_0 : i32, i32
  }
  func.func @transform_1(%arg0: i32) -> (i32, i32) {
    %c0_i32 = arith.constant 0 : i32
    %c0_i32_0 = arith.constant 0 : i32
    %c0_i32_1 = arith.constant 0 : i32
    return %c0_i32, %c0_i32_0 : i32, i32
  }
  func.func @transform_2(%arg0: i32) -> (i32, i32) {
    %c0_i32 = arith.constant 0 : i32
    %c0_i32_0 = arith.constant 0 : i32
    %c0_i32_1 = arith.constant 0 : i32
    return %c0_i32, %c0_i32_0 : i32, i32
  }
  func.func @transform_3(%arg0: i32) -> (i32, i32) {
    %c0_i32 = arith.constant 0 : i32
    %c0_i32_0 = arith.constant 0 : i32
    %c0_i32_1 = arith.constant 0 : i32
    return %c0_i32, %c0_i32_0 : i32, i32
  }
}

module attributes {stable_mosaic.version = 11 : i64} {
  func.func @_decoder_kernel(%arg0: i32, %arg1: memref<1x2x16xf32, #tpu.memory_space<vmem>>, %arg2: memref<2x32xf32, #tpu.memory_space<vmem>>, %arg3: memref<2x8x64xf32, #tpu.memory_space<vmem>>, %arg4: memref<2x8x32xf32, #tpu.memory_space<vmem>>, %arg5: memref<2x8xf32, #tpu.memory_space<vmem>>, %arg6: memref<32x32xf32, #tpu.memory_space<vmem>>, %arg7: memref<1x32xf32, #tpu.memory_space<vmem>>, %arg8: memref<80x96xf32, #tpu.memory_space<vmem>>, %arg9: memref<32x96xf32, #tpu.memory_space<vmem>>, %arg10: memref<1x96xf32, #tpu.memory_space<vmem>>, %arg11: memref<1x96xf32, #tpu.memory_space<vmem>>, %arg12: memref<112x50xf32, #tpu.memory_space<vmem>>, %arg13: memref<1x50xf32, #tpu.memory_space<vmem>>, %arg14: memref<1x2x50xf32, #tpu.memory_space<vmem>>, %arg15: memref<2x32xf32, #tpu.memory_space<vmem>>) attributes {dimension_semantics = [#tpu.dimension_semantics<arbitrary>], iteration_bounds = array<i64: 5>, scalar_prefetch = 0 : i64, scratch_operands = 1 : i64, tpu.core_type = #tpu.core_type<tc>, window_params = [{transform_indices = @transform_0, window_bounds = array<i64: 1, 2, 16>}, {pipeline_mode = #tpu.pipeline_mode<synchronous>, transform_indices = @transform_1, window_bounds = array<i64: 2, 32>}, {pipeline_mode = #tpu.pipeline_mode<synchronous>, transform_indices = @transform_2, window_bounds = array<i64: 2, 8, 64>}, {pipeline_mode = #tpu.pipeline_mode<synchronous>, transform_indices = @transform_3, window_bounds = array<i64: 2, 8, 32>}, {pipeline_mode = #tpu.pipeline_mode<synchronous>, transform_indices = @transform_4, window_bounds = array<i64: 2, 8>}, {pipeline_mode = #tpu.pipeline_mode<synchronous>, transform_indices = @transform_5, window_bounds = array<i64: 32, 32>}, {pipeline_mode = #tpu.pipeline_mode<synchronous>, transform_indices = @transform_6, window_bounds = array<i64: 1, 32>}, {pipeline_mode = #tpu.pipeline_mode<synchronous>, transform_indices = @transform_7, window_bounds = array<i64: 80, 96>}, {pipeline_mode = #tpu.pipeline_mode<synchronous>, transform_indices = @transform_8, window_bounds = array<i64: 32, 96>}, {pipeline_mode = #tpu.pipeline_mode<synchronous>, transform_indices = @transform_9, window_bounds = array<i64: 1, 96>}, {pipeline_mode = #tpu.pipeline_mode<synchronous>, transform_indices = @transform_10, window_bounds = array<i64: 1, 96>}, {pipeline_mode = #tpu.pipeline_mode<synchronous>, transform_indices = @transform_11, window_bounds = array<i64: 112, 50>}, {pipeline_mode = #tpu.pipeline_mode<synchronous>, transform_indices = @transform_12, window_bounds = array<i64: 1, 50>}, {transform_indices = @transform_13, window_bounds = array<i64: 1, 2, 50>}]} {
    %c0_i32 = arith.constant 0 : i32
    %0 = arith.cmpi eq, %arg0, %c0_i32 : i32
    %1 = arith.extui %0 : i1 to i32
    %c0_i32_0 = arith.constant 0 : i32
    %2 = arith.cmpi ne, %1, %c0_i32_0 : i32
    scf.if %2 {
      %c0_52 = arith.constant 0 : index
      %c0_53 = arith.constant 0 : index
      %91 = vector.load %arg2[%c0_52, %c0_53] : memref<2x32xf32, #tpu.memory_space<vmem>>, vector<2x32xf32>
      %c0_54 = arith.constant 0 : index
      %c0_55 = arith.constant 0 : index
      %92 = vector.load %arg15[%c0_54, %c0_55] : memref<2x32xf32, #tpu.memory_space<vmem>>, vector<2x32xf32>
      tpu.vector_store %arg15[%c0_54, %c0_55], %91 {strides = array<i32>} : memref<2x32xf32, #tpu.memory_space<vmem>>, vector<2x32xf32>,
    } else {
    }
    %c0 = arith.constant 0 : index
    %c0_1 = arith.constant 0 : index
    %3 = vector.load %arg15[%c0, %c0_1] : memref<2x32xf32, #tpu.memory_space<vmem>>, vector<2x32xf32>
    %c0_2 = arith.constant 0 : index
    %c0_3 = arith.constant 0 : index
    %c0_4 = arith.constant 0 : index
    %4 = vector.load %arg1[%c0_2, %c0_3, %c0_4] : memref<1x2x16xf32, #tpu.memory_space<vmem>>, vector<1x2x16xf32>
    %5 = vector.shape_cast %4 : vector<1x2x16xf32> to vector<2x16xf32>
    %c0_5 = arith.constant 0 : index
    %c0_6 = arith.constant 0 : index
    %6 = vector.load %arg6[%c0_5, %c0_6] : memref<32x32xf32, #tpu.memory_space<vmem>>, vector<32x32xf32>
    %cst = arith.constant dense<0.000000e+00> : vector<2x32xf32>
    %7 = tpu.matmul %3, %6, %cst {dimension_numbers = #tpu.dot_dimension_numbers<[1], [0], [0], [1], [0, 0, 1, 1], [], []>} : vector<2x32xf32>, vector<32x32xf32>, vector<2x32xf32> -> vector<2x32xf32>
    %8 = vector.shape_cast %7 : vector<2x32xf32> to vector<2x1x32xf32>
    %c0_7 = arith.constant 0 : index
    %c0_8 = arith.constant 0 : index
    %c0_9 = arith.constant 0 : index
    %9 = vector.load %arg4[%c0_7, %c0_8, %c0_9] : memref<2x8x32xf32, #tpu.memory_space<vmem>>, vector<2x8x32xf32>
    %10 = vector.broadcast %8 : vector<2x1x32xf32> to vector<2x8x32xf32>
    %11 = arith.addf %10, %9 : vector<2x8x32xf32>
    %12 = math.tanh %11 : vector<2x8x32xf32>
    %c0_10 = arith.constant 0 : index
    %c0_11 = arith.constant 0 : index
    %13 = vector.load %arg7[%c0_10, %c0_11] : memref<1x32xf32, #tpu.memory_space<vmem>>, vector<1x32xf32>
    %14 = vector.shape_cast %13 : vector<1x32xf32> to vector<1x1x32xf32>
    %15 = vector.broadcast %14 : vector<1x1x32xf32> to vector<2x8x32xf32>
    %16 = arith.mulf %12, %15 : vector<2x8x32xf32>
    %cst_12 = arith.constant dense<0.000000e+00> : vector<2x8xf32>
    %17 = vector.multi_reduction <add>, %16, %cst_12 [2] : vector<2x8x32xf32> to vector<2x8xf32>
    %c0_13 = arith.constant 0 : index
    %c0_14 = arith.constant 0 : index
    %18 = vector.load %arg5[%c0_13, %c0_14] : memref<2x8xf32, #tpu.memory_space<vmem>>, vector<2x8xf32>
    %cst_15 = arith.constant 0.000000e+00 : f32
    %19 = vector.broadcast %cst_15 : f32 to vector<2x8xf32>
    %20 = arith.cmpf oeq, %18, %19 : vector<2x8xf32>
    %cst_16 = arith.constant -1.000000e+10 : f32
    %21 = vector.broadcast %cst_16 : f32 to vector<2x8xf32>
    %22 = arith.select %20, %21, %17 : vector<2x8xi1>, vector<2x8xf32>
    %cst_17 = arith.constant dense<0xFF800000> : vector<2xf32>
    %23 = vector.multi_reduction <maximumf>, %22, %cst_17 [1] : vector<2x8xf32> to vector<2xf32>
    %24 = vector.shape_cast %23 : vector<2xf32> to vector<2x1xf32>
    %25 = vector.broadcast %24 : vector<2x1xf32> to vector<2x8xf32>
    %26 = arith.subf %22, %25 : vector<2x8xf32>
    %27 = math.exp %26 : vector<2x8xf32>
    %cst_18 = arith.constant dense<0.000000e+00> : vector<2xf32>
    %28 = vector.multi_reduction <add>, %27, %cst_18 [1] : vector<2x8xf32> to vector<2xf32>
    %29 = vector.shape_cast %28 : vector<2xf32> to vector<2x1xf32>
    %30 = vector.broadcast %29 : vector<2x1xf32> to vector<2x8xf32>
    %31 = arith.divf %27, %30 : vector<2x8xf32>
    %32 = vector.shape_cast %31 : vector<2x8xf32> to vector<2x8x1xf32>
    %c0_19 = arith.constant 0 : index
    %c0_20 = arith.constant 0 : index
    %c0_21 = arith.constant 0 : index
    %33 = vector.load %arg3[%c0_19, %c0_20, %c0_21] : memref<2x8x64xf32, #tpu.memory_space<vmem>>, vector<2x8x64xf32>
    %34 = vector.broadcast %32 : vector<2x8x1xf32> to vector<2x8x64xf32>
    %35 = arith.mulf %34, %33 : vector<2x8x64xf32>
    %cst_22 = arith.constant dense<0.000000e+00> : vector<2x64xf32>
    %36 = vector.multi_reduction <add>, %35, %cst_22 [1] : vector<2x8x64xf32> to vector<2x64xf32>
    %c0_23 = arith.constant 0 : index
    %c0_24 = arith.constant 0 : index
    %37 = vector.load %arg8[%c0_23, %c0_24] : memref<80x96xf32, #tpu.memory_space<vmem>>, vector<16x96xf32>
    %cst_25 = arith.constant dense<0.000000e+00> : vector<2x96xf32>
    %38 = tpu.matmul %5, %37, %cst_25 {dimension_numbers = #tpu.dot_dimension_numbers<[1], [0], [0], [1], [0, 0, 1, 1], [], []>} : vector<2x16xf32>, vector<16x96xf32>, vector<2x96xf32> -> vector<2x96xf32>
    %c16 = arith.constant 16 : index
    %c0_26 = arith.constant 0 : index
    %39 = vector.load %arg8[%c16, %c0_26] : memref<80x96xf32, #tpu.memory_space<vmem>>, vector<64x96xf32>
    %cst_27 = arith.constant dense<0.000000e+00> : vector<2x96xf32>
    %40 = tpu.matmul %36, %39, %cst_27 {dimension_numbers = #tpu.dot_dimension_numbers<[1], [0], [0], [1], [0, 0, 1, 1], [], []>} : vector<2x64xf32>, vector<64x96xf32>, vector<2x96xf32> -> vector<2x96xf32>
    %41 = arith.addf %38, %40 : vector<2x96xf32>
    %c0_28 = arith.constant 0 : index
    %c0_29 = arith.constant 0 : index
    %42 = vector.load %arg10[%c0_28, %c0_29] : memref<1x96xf32, #tpu.memory_space<vmem>>, vector<1x96xf32>
    %43 = vector.broadcast %42 : vector<1x96xf32> to vector<2x96xf32>
    %44 = arith.addf %41, %43 : vector<2x96xf32>
    %c0_30 = arith.constant 0 : index
    %c0_31 = arith.constant 0 : index
    %45 = vector.load %arg9[%c0_30, %c0_31] : memref<32x96xf32, #tpu.memory_space<vmem>>, vector<32x96xf32>
    %cst_32 = arith.constant dense<0.000000e+00> : vector<2x96xf32>
    %46 = tpu.matmul %3, %45, %cst_32 {dimension_numbers = #tpu.dot_dimension_numbers<[1], [0], [0], [1], [0, 0, 1, 1], [], []>} : vector<2x32xf32>, vector<32x96xf32>, vector<2x96xf32> -> vector<2x96xf32>
    %c0_33 = arith.constant 0 : index
    %c0_34 = arith.constant 0 : index
    %47 = vector.load %arg11[%c0_33, %c0_34] : memref<1x96xf32, #tpu.memory_space<vmem>>, vector<1x96xf32>
    %48 = vector.broadcast %47 : vector<1x96xf32> to vector<2x96xf32>
    %49 = arith.addf %46, %48 : vector<2x96xf32>
    %50 = vector.extract_strided_slice %44 {offsets = [0, 0], sizes = [2, 32], strides = [1, 1]} : vector<2x96xf32> to vector<2x32xf32>
    %51 = vector.extract_strided_slice %49 {offsets = [0, 0], sizes = [2, 32], strides = [1, 1]} : vector<2x96xf32> to vector<2x32xf32>
    %52 = arith.addf %50, %51 : vector<2x32xf32>
    %53 = arith.negf %52 : vector<2x32xf32>
    %54 = math.exp %53 : vector<2x32xf32>
    %cst_35 = arith.constant 1.000000e+00 : f32
    %55 = vector.broadcast %cst_35 : f32 to vector<2x32xf32>
    %56 = arith.addf %55, %54 : vector<2x32xf32>
    %57 = arith.divf %55, %56 : vector<2x32xf32>
    %58 = vector.extract_strided_slice %44 {offsets = [0, 32], sizes = [2, 32], strides = [1, 1]} : vector<2x96xf32> to vector<2x32xf32>
    %59 = vector.extract_strided_slice %49 {offsets = [0, 32], sizes = [2, 32], strides = [1, 1]} : vector<2x96xf32> to vector<2x32xf32>
    %60 = arith.addf %58, %59 : vector<2x32xf32>
    %61 = arith.negf %60 : vector<2x32xf32>
    %62 = math.exp %61 : vector<2x32xf32>
    %cst_36 = arith.constant 1.000000e+00 : f32
    %63 = vector.broadcast %cst_36 : f32 to vector<2x32xf32>
    %64 = arith.addf %63, %62 : vector<2x32xf32>
    %65 = arith.divf %63, %64 : vector<2x32xf32>
    %66 = vector.extract_strided_slice %44 {offsets = [0, 64], sizes = [2, 32], strides = [1, 1]} : vector<2x96xf32> to vector<2x32xf32>
    %67 = vector.extract_strided_slice %49 {offsets = [0, 64], sizes = [2, 32], strides = [1, 1]} : vector<2x96xf32> to vector<2x32xf32>
    %68 = arith.mulf %57, %67 : vector<2x32xf32>
    %69 = arith.addf %66, %68 : vector<2x32xf32>
    %70 = math.tanh %69 : vector<2x32xf32>
    %cst_37 = arith.constant 1.000000e+00 : f32
    %71 = vector.broadcast %cst_37 : f32 to vector<2x32xf32>
    %72 = arith.subf %71, %65 : vector<2x32xf32>
    %73 = arith.mulf %72, %70 : vector<2x32xf32>
    %74 = arith.mulf %65, %3 : vector<2x32xf32>
    %75 = arith.addf %73, %74 : vector<2x32xf32>
    %c0_38 = arith.constant 0 : index
    %c0_39 = arith.constant 0 : index
    %76 = vector.load %arg15[%c0_38, %c0_39] : memref<2x32xf32, #tpu.memory_space<vmem>>, vector<2x32xf32>
    tpu.vector_store %arg15[%c0_38, %c0_39], %75 {strides = array<i32>} : memref<2x32xf32, #tpu.memory_space<vmem>>, vector<2x32xf32>,
    %c0_40 = arith.constant 0 : index
    %c0_41 = arith.constant 0 : index
    %77 = vector.load %arg12[%c0_40, %c0_41] : memref<112x50xf32, #tpu.memory_space<vmem>>, vector<32x50xf32>
    %cst_42 = arith.constant dense<0.000000e+00> : vector<2x50xf32>
    %78 = tpu.matmul %75, %77, %cst_42 {dimension_numbers = #tpu.dot_dimension_numbers<[1], [0], [0], [1], [0, 0, 1, 1], [], []>} : vector<2x32xf32>, vector<32x50xf32>, vector<2x50xf32> -> vector<2x50xf32>
    %c32 = arith.constant 32 : index
    %c0_43 = arith.constant 0 : index
    %79 = vector.load %arg12[%c32, %c0_43] : memref<112x50xf32, #tpu.memory_space<vmem>>, vector<16x50xf32>
    %cst_44 = arith.constant dense<0.000000e+00> : vector<2x50xf32>
    %80 = tpu.matmul %5, %79, %cst_44 {dimension_numbers = #tpu.dot_dimension_numbers<[1], [0], [0], [1], [0, 0, 1, 1], [], []>} : vector<2x16xf32>, vector<16x50xf32>, vector<2x50xf32> -> vector<2x50xf32>
    %81 = arith.addf %78, %80 : vector<2x50xf32>
    %c48 = arith.constant 48 : index
    %c0_45 = arith.constant 0 : index
    %82 = vector.load %arg12[%c48, %c0_45] : memref<112x50xf32, #tpu.memory_space<vmem>>, vector<64x50xf32>
    %cst_46 = arith.constant dense<0.000000e+00> : vector<2x50xf32>
    %83 = tpu.matmul %36, %82, %cst_46 {dimension_numbers = #tpu.dot_dimension_numbers<[1], [0], [0], [1], [0, 0, 1, 1], [], []>} : vector<2x64xf32>, vector<64x50xf32>, vector<2x50xf32> -> vector<2x50xf32>
    %84 = arith.addf %81, %83 : vector<2x50xf32>
    %c0_47 = arith.constant 0 : index
    %c0_48 = arith.constant 0 : index
    %85 = vector.load %arg13[%c0_47, %c0_48] : memref<1x50xf32, #tpu.memory_space<vmem>>, vector<1x50xf32>
    %86 = vector.broadcast %85 : vector<1x50xf32> to vector<2x50xf32>
    %87 = arith.addf %84, %86 : vector<2x50xf32>
    %c0_49 = arith.constant 0 : index
    %c0_50 = arith.constant 0 : index
    %c0_51 = arith.constant 0 : index
    %88 = vector.load %arg14[%c0_49, %c0_50, %c0_51] : memref<1x2x50xf32, #tpu.memory_space<vmem>>, vector<1x2x50xf32>
    %89 = vector.shape_cast %88 : vector<1x2x50xf32> to vector<2x50xf32>
    %90 = vector.shape_cast %87 : vector<2x50xf32> to vector<1x2x50xf32>
    tpu.vector_store %arg14[%c0_49, %c0_50, %c0_51], %90 {strides = array<i32>} : memref<1x2x50xf32, #tpu.memory_space<vmem>>, vector<1x2x50xf32>,
    return
  }
  func.func @transform_0(%arg0: i32) -> (i32, i32, i32) {
    %c0_i32 = arith.constant 0 : i32
    %c0_i32_0 = arith.constant 0 : i32
    %c0_i32_1 = arith.constant 0 : i32
    return %arg0, %c0_i32, %c0_i32_0 : i32, i32, i32
  }
  func.func @transform_1(%arg0: i32) -> (i32, i32) {
    %c0_i32 = arith.constant 0 : i32
    %c0_i32_0 = arith.constant 0 : i32
    %c0_i32_1 = arith.constant 0 : i32
    return %c0_i32, %c0_i32_0 : i32, i32
  }
  func.func @transform_2(%arg0: i32) -> (i32, i32, i32) {
    %c0_i32 = arith.constant 0 : i32
    %c0_i32_0 = arith.constant 0 : i32
    %c0_i32_1 = arith.constant 0 : i32
    %c0_i32_2 = arith.constant 0 : i32
    return %c0_i32, %c0_i32_0, %c0_i32_1 : i32, i32, i32
  }
  func.func @transform_3(%arg0: i32) -> (i32, i32, i32) {
    %c0_i32 = arith.constant 0 : i32
    %c0_i32_0 = arith.constant 0 : i32
    %c0_i32_1 = arith.constant 0 : i32
    %c0_i32_2 = arith.constant 0 : i32
    return %c0_i32, %c0_i32_0, %c0_i32_1 : i32, i32, i32
  }
  func.func @transform_4(%arg0: i32) -> (i32, i32) {
    %c0_i32 = arith.constant 0 : i32
    %c0_i32_0 = arith.constant 0 : i32
    %c0_i32_1 = arith.constant 0 : i32
    return %c0_i32, %c0_i32_0 : i32, i32
  }
  func.func @transform_5(%arg0: i32) -> (i32, i32) {
    %c0_i32 = arith.constant 0 : i32
    %c0_i32_0 = arith.constant 0 : i32
    %c0_i32_1 = arith.constant 0 : i32
    return %c0_i32, %c0_i32_0 : i32, i32
  }
  func.func @transform_6(%arg0: i32) -> (i32, i32) {
    %c0_i32 = arith.constant 0 : i32
    %c0_i32_0 = arith.constant 0 : i32
    %c0_i32_1 = arith.constant 0 : i32
    return %c0_i32, %c0_i32_0 : i32, i32
  }
  func.func @transform_7(%arg0: i32) -> (i32, i32) {
    %c0_i32 = arith.constant 0 : i32
    %c0_i32_0 = arith.constant 0 : i32
    %c0_i32_1 = arith.constant 0 : i32
    return %c0_i32, %c0_i32_0 : i32, i32
  }
  func.func @transform_8(%arg0: i32) -> (i32, i32) {
    %c0_i32 = arith.constant 0 : i32
    %c0_i32_0 = arith.constant 0 : i32
    %c0_i32_1 = arith.constant 0 : i32
    return %c0_i32, %c0_i32_0 : i32, i32
  }
  func.func @transform_9(%arg0: i32) -> (i32, i32) {
    %c0_i32 = arith.constant 0 : i32
    %c0_i32_0 = arith.constant 0 : i32
    %c0_i32_1 = arith.constant 0 : i32
    return %c0_i32, %c0_i32_0 : i32, i32
  }
  func.func @transform_10(%arg0: i32) -> (i32, i32) {
    %c0_i32 = arith.constant 0 : i32
    %c0_i32_0 = arith.constant 0 : i32
    %c0_i32_1 = arith.constant 0 : i32
    return %c0_i32, %c0_i32_0 : i32, i32
  }
  func.func @transform_11(%arg0: i32) -> (i32, i32) {
    %c0_i32 = arith.constant 0 : i32
    %c0_i32_0 = arith.constant 0 : i32
    %c0_i32_1 = arith.constant 0 : i32
    return %c0_i32, %c0_i32_0 : i32, i32
  }
  func.func @transform_12(%arg0: i32) -> (i32, i32) {
    %c0_i32 = arith.constant 0 : i32
    %c0_i32_0 = arith.constant 0 : i32
    %c0_i32_1 = arith.constant 0 : i32
    return %c0_i32, %c0_i32_0 : i32, i32
  }
  func.func @transform_13(%arg0: i32) -> (i32, i32, i32) {
    %c0_i32 = arith.constant 0 : i32
    %c0_i32_0 = arith.constant 0 : i32
    %c0_i32_1 = arith.constant 0 : i32
    return %arg0, %c0_i32, %c0_i32_0 : i32, i32, i32
  }
}

</mosaic_0001>

<llo_original>
// kernel: _lambda_.6
$region0: #{_lambda_.6}
  #allocation0 [shape = 'u32[]', space=smem, size = 0x4, offset = 0x4, fixed_abs, tag = 'smem constant byte address 0x4 - core index']
  #allocation1 [shape = 'u32[144,128]{1,0:T(1,128)}', space=vmem, size = 0x12000, scoped, tag = 'internal scratch']
  %s0 = inlined_call_operand.vmem [shape: f32[16,16], index: 0, kind: input, shape index: {}]
  %s1 = inlined_call_operand.vmem [shape: f32[16,96], index: 1, kind: input, shape index: {}]
  %s2 = inlined_call_operand.vmem [shape: f32[1,96], index: 2, kind: input, shape index: {}]
  %s3 = inlined_call_operand.vmem [shape: f32[16,96], index: 3, kind: output, shape index: {}]
  %s4 = sld [smem:[#allocation0]]
  $region22: #{_lambda_.6} parent=0
    _
  %s6 = ssub.s32 1, %s4
  %s7 = scalar_select 0, %s6, %s4
  // Predicated region
  $region2: #{_lambda_.6} parent=0 // pred_check
    _
  $region3: #{_lambda_.6} parent=0 // pred_check_branch
    %9 = sbr.rel (0) target = $region5
  $region4: #{_lambda_.6} parent=0 // pred_region
    _
  $region5: #{_lambda_.6} parent=0 // pred_fallthru
    _
  // Predicated region
  $region6: #{_lambda_.6} parent=0 // pred_check
    _
  $region7: #{_lambda_.6} parent=0 // pred_check_branch
    %11 = sbr.rel (0) target = $region9
  $region8: #{_lambda_.6} parent=0 // pred_region
    _
  $region9: #{_lambda_.6} parent=0 // pred_fallthru
    _
  // Predicated region
  $region10: #{_lambda_.6} parent=0 // pred_check
    _
  $region11: #{_lambda_.6} parent=0 // pred_check_branch
    %13 = sbr.rel (0) target = $region13
  $region12: #{_lambda_.6} parent=0 // pred_region
    _
  $region13: #{_lambda_.6} parent=0 // pred_fallthru
    _
  %v14 = vld [vmem:[%s0] sm:$0xff]
  %v15 = vld [vmem:[%s0 + $0x8] sm:$0xff]
  %v16 = vld [vmem:[%s1] sm:$0xff]
  %v17 = vld [vmem:[%s1 + $0x8] sm:$0xff]
  %v18 = vld [vmem:[%s2] sm:$0x1]
  %v20 = vlaneseq
  %v21 = vshrl.u32 %v20, 7
  %v22 = vsub.s32 0, %v21
  %v23 = vrot.slane %v18, %v22
  %vm25 = vcmask 130048
  %v27 = vsel %vm25, %v14, 0
  %v30 = vsel %vm25, %v15, 0
  %32 = vmatprep.subr.mxu0 0.0
  %33 = vmatpush1.msra.mxu0 0.0
  %34 = vmatprep.subr.mxu0 0.0
  %35 = vmatpush1.msra.mxu0 0.0
  %36 = vmatprep.subr.mxu0 0.0
  %37 = vmatpush1.msra.mxu0 0.0
  %38 = vmatprep.subr.mxu0 0.0
  %39 = vmatpush1.msra.mxu0 0.0
  %40 = vmatprep.subr.mxu0 0.0
  %41 = vmatpush1.msra.mxu0 0.0
  %42 = vmatprep.subr.mxu0 0.0
  %43 = vmatpush1.msra.mxu0 0.0
  %44 = vmatprep.subr.mxu0 0.0
  %45 = vmatpush1.msra.mxu0 0.0
  %46 = vmatprep.subr.mxu0 0.0
  %47 = vmatpush1.msra.mxu0 0.0
  %48 = vmatprep.subr.mxu0 0.0
  %49 = vmatpush1.msra.mxu0 0.0
  %50 = vmatprep.subr.mxu0 0.0
  %51 = vmatpush1.msra.mxu0 0.0
  %52 = vmatprep.subr.mxu0 0.0
  %53 = vmatpush1.msra.mxu0 0.0
  %54 = vmatprep.subr.mxu0 0.0
  %55 = vmatpush1.msra.mxu0 0.0
  %56 = vmatprep.subr.mxu0 0.0
  %57 = vmatpush1.msra.mxu0 0.0
  %58 = vmatprep.subr.mxu0 0.0
  %59 = vmatpush1.msra.mxu0 0.0
  %60 = vmatprep.subr.mxu0 0.0
  %61 = vmatpush1.msra.mxu0 %v17
  %62 = vmatprep.subr.mxu0 0.0
  %63 = vmatpush1.msra.mxu0 %v16
  %64 = vmatprep.subr.mxu0 0.0
  %65 = vmatpush2.msra.mxu0 0.0
  %66 = vmatprep.subr.mxu0 0.0
  %67 = vmatpush2.msra.mxu0 0.0
  %68 = vmatprep.subr.mxu0 0.0
  %69 = vmatpush2.msra.mxu0 0.0
  %70 = vmatprep.subr.mxu0 0.0
  %71 = vmatpush2.msra.mxu0 0.0
  %72 = vmatprep.subr.mxu0 0.0
  %73 = vmatpush2.msra.mxu0 0.0
  %74 = vmatprep.subr.mxu0 0.0
  %75 = vmatpush2.msra.mxu0 0.0
  %76 = vmatprep.subr.mxu0 0.0
  %77 = vmatpush2.msra.mxu0 0.0
  %78 = vmatprep.subr.mxu0 0.0
  %79 = vmatpush2.msra.mxu0 0.0
  %80 = vmatprep.subr.mxu0 0.0
  %81 = vmatpush2.msra.mxu0 0.0
  %82 = vmatprep.subr.mxu0 0.0
  %83 = vmatpush2.msra.mxu0 0.0
  %84 = vmatprep.subr.mxu0 0.0
  %85 = vmatpush2.msra.mxu0 0.0
  %86 = vmatprep.subr.mxu0 0.0
  %87 = vmatpush2.msra.mxu0 0.0
  %88 = vmatprep.subr.mxu0 0.0
  %89 = vmatpush2.msra.mxu0 0.0
  %90 = vmatprep.subr.mxu0 0.0
  %91 = vmatpush2.msra.mxu0 0.0
  %92 = vmatprep.subr.mxu0 0.0
  %93 = vmatpush2.msra.mxu0 0.0
  %94 = vmatprep.subr.mxu0 0.0
  %95 = vmatpush2.msra.mxu0 0.0
  %96 = vmatprep.mubr.f32.mxu0 0.0
  %97 = vmatmul.mubr.f32.gmra.mxu0 %v27
  %v98 = vpop.f32.mrf.mxu0
  %v99 = vadd.f32 %v23, %v98
  %v100 = vpop.f32.mrf.mxu0
  %101 = vmatprep.mubr.f32.mxu0 0.0
  %102 = vmatmul.mubr.f32.gmra.mxu0 %v30
  %v103 = vpop.f32.mrf.mxu0
  %v104 = vadd.f32 %v23, %v103
  %v105 = vpop.f32.mrf.mxu0
  %106 = vdwg.mxu0
  %vm107 = vcmask 785408
  %108 = vst.msk [vmem:[%s3] sm:$0xff] %vm107, %v99
  %109 = vst.msk [vmem:[%s3 + $0x8] sm:$0xff] %vm107, %v104
  // Predicated region
  $region14: #{_lambda_.6} parent=0 // pred_check
    _
  $region15: #{_lambda_.6} parent=0 // pred_check_branch
    %111 = sbr.rel (0) target = $region17
  $region16: #{_lambda_.6} parent=0 // pred_region
    _
  $region17: #{_lambda_.6} parent=0 // pred_fallthru
    _
  // Predicated region
  $region18: #{_lambda_.6} parent=0 // pred_check
    _
  $region19: #{_lambda_.6} parent=0 // pred_check_branch
    %113 = sbr.rel (0) target = $region21
  $region20: #{_lambda_.6} parent=0 // pred_region
    _
  $region21: #{_lambda_.6} parent=0 // pred_fallthru
    _

// kernel: _lambda_.10
$region0: #{_lambda_.10}
  #allocation0 [shape = 'u32[]', space=smem, size = 0x4, offset = 0x4, fixed_abs, tag = 'smem constant byte address 0x4 - core index']
  #allocation1 [shape = 'u32[144,128]{1,0:T(1,128)}', space=vmem, size = 0x12000, scoped, tag = 'internal scratch']
  %s0 = inlined_call_operand.vmem [shape: f32[16,64], index: 0, kind: input, shape index: {}]
  %s1 = inlined_call_operand.vmem [shape: f32[64,32], index: 1, kind: input, shape index: {}]
  %s2 = inlined_call_operand.vmem [shape: f32[1,32], index: 2, kind: input, shape index: {}]
  %s3 = inlined_call_operand.vmem [shape: f32[16,32], index: 3, kind: output, shape index: {}]
  %s4 = sld [smem:[#allocation0]]
  $region22: #{_lambda_.10} parent=0
    _
  %s6 = ssub.s32 1, %s4
  %s7 = scalar_select 0, %s6, %s4
  // Predicated region
  $region2: #{_lambda_.10} parent=0 // pred_check
    _
  $region3: #{_lambda_.10} parent=0 // pred_check_branch
    %9 = sbr.rel (0) target = $region5
  $region4: #{_lambda_.10} parent=0 // pred_region
    _
  $region5: #{_lambda_.10} parent=0 // pred_fallthru
    _
  // Predicated region
  $region6: #{_lambda_.10} parent=0 // pred_check
    _
  $region7: #{_lambda_.10} parent=0 // pred_check_branch
    %11 = sbr.rel (0) target = $region9
  $region8: #{_lambda_.10} parent=0 // pred_region
    _
  $region9: #{_lambda_.10} parent=0 // pred_fallthru
    _
  // Predicated region
  $region10: #{_lambda_.10} parent=0 // pred_check
    _
  $region11: #{_lambda_.10} parent=0 // pred_check_branch
    %13 = sbr.rel (0) target = $region13
  $region12: #{_lambda_.10} parent=0 // pred_region
    _
  $region13: #{_lambda_.10} parent=0 // pred_fallthru
    _
  %v14 = vld [vmem:[%s0] sm:$0xff]
  %v15 = vld [vmem:[%s0 + $0x8] sm:$0xff]
  %v16 = vld [vmem:[%s1] sm:$0xff]
  %v17 = vld [vmem:[%s1 + $0x8] sm:$0xff]
  %v18 = vld [vmem:[%s1 + $0x10] sm:$0xff]
  %v19 = vld [vmem:[%s1 + $0x18] sm:$0xff]
  %v20 = vld [vmem:[%s1 + $0x20] sm:$0xff]
  %v21 = vld [vmem:[%s1 + $0x28] sm:$0xff]
  %v22 = vld [vmem:[%s1 + $0x30] sm:$0xff]
  %v23 = vld [vmem:[%s1 + $0x38] sm:$0xff]
  %v24 = vld [vmem:[%s2] sm:$0x1]
  %v26 = vlaneseq
  %v27 = vshrl.u32 %v26, 7
  %v28 = vsub.s32 0, %v27
  %v29 = vrot.slane %v24, %v28
  %vm31 = vcmask 523264
  %v33 = vsel %vm31, %v14, 0
  %v36 = vsel %vm31, %v15, 0
  %38 = vmatprep.subr.mxu0 0.0
  %39 = vmatpush1.msra.mxu0 0.0
  %40 = vmatprep.subr.mxu0 0.0
  %41 = vmatpush1.msra.mxu0 0.0
  %42 = vmatprep.subr.mxu0 0.0
  %43 = vmatpush1.msra.mxu0 0.0
  %44 = vmatprep.subr.mxu0 0.0
  %45 = vmatpush1.msra.mxu0 0.0
  %46 = vmatprep.subr.mxu0 0.0
  %47 = vmatpush1.msra.mxu0 0.0
  %48 = vmatprep.subr.mxu0 0.0
  %49 = vmatpush1.msra.mxu0 0.0
  %50 = vmatprep.subr.mxu0 0.0
  %51 = vmatpush1.msra.mxu0 0.0
  %52 = vmatprep.subr.mxu0 0.0
  %53 = vmatpush1.msra.mxu0 0.0
  %54 = vmatprep.subr.mxu0 0.0
  %55 = vmatpush1.msra.mxu0 %v23
  %56 = vmatprep.subr.mxu0 0.0
  %57 = vmatpush1.msra.mxu0 %v22
  %58 = vmatprep.subr.mxu0 0.0
  %59 = vmatpush1.msra.mxu0 %v21
  %60 = vmatprep.subr.mxu0 0.0
  %61 = vmatpush1.msra.mxu0 %v20
  %62 = vmatprep.subr.mxu0 0.0
  %63 = vmatpush1.msra.mxu0 %v19
  %64 = vmatprep.subr.mxu0 0.0
  %65 = vmatpush1.msra.mxu0 %v18
  %66 = vmatprep.subr.mxu0 0.0
  %67 = vmatpush1.msra.mxu0 %v17
  %68 = vmatprep.subr.mxu0 0.0
  %69 = vmatpush1.msra.mxu0 %v16
  %70 = vmatprep.subr.mxu0 0.0
  %71 = vmatpush2.msra.mxu0 0.0
  %72 = vmatprep.subr.mxu0 0.0
  %73 = vmatpush2.msra.mxu0 0.0
  %74 = vmatprep.subr.mxu0 0.0
  %75 = vmatpush2.msra.mxu0 0.0
  %76 = vmatprep.subr.mxu0 0.0
  %77 = vmatpush2.msra.mxu0 0.0
  %78 = vmatprep.subr.mxu0 0.0
  %79 = vmatpush2.msra.mxu0 0.0
  %80 = vmatprep.subr.mxu0 0.0
  %81 = vmatpush2.msra.mxu0 0.0
  %82 = vmatprep.subr.mxu0 0.0
  %83 = vmatpush2.msra.mxu0 0.0
  %84 = vmatprep.subr.mxu0 0.0
  %85 = vmatpush2.msra.mxu0 0.0
  %86 = vmatprep.subr.mxu0 0.0
  %87 = vmatpush2.msra.mxu0 0.0
  %88 = vmatprep.subr.mxu0 0.0
  %89 = vmatpush2.msra.mxu0 0.0
  %90 = vmatprep.subr.mxu0 0.0
  %91 = vmatpush2.msra.mxu0 0.0
  %92 = vmatprep.subr.mxu0 0.0
  %93 = vmatpush2.msra.mxu0 0.0
  %94 = vmatprep.subr.mxu0 0.0
  %95 = vmatpush2.msra.mxu0 0.0
  %96 = vmatprep.subr.mxu0 0.0
  %97 = vmatpush2.msra.mxu0 0.0
  %98 = vmatprep.subr.mxu0 0.0
  %99 = vmatpush2.msra.mxu0 0.0
  %100 = vmatprep.subr.mxu0 0.0
  %101 = vmatpush2.msra.mxu0 0.0
  %102 = vmatprep.mubr.f32.mxu0 0.0
  %103 = vmatmul.mubr.f32.gmra.mxu0 %v33
  %v104 = vpop.f32.mrf.mxu0
  %v105 = vadd.f32 %v29, %v104
  %v106 = vpop.f32.mrf.mxu0
  %107 = vmatprep.mubr.f32.mxu0 0.0
  %108 = vmatmul.mubr.f32.gmra.mxu0 %v36
  %v109 = vpop.f32.mrf.mxu0
  %v110 = vadd.f32 %v29, %v109
  %v111 = vpop.f32.mrf.mxu0
  %112 = vdwg.mxu0
  %vm113 = vcmask 261120
  %114 = vst.msk [vmem:[%s3] sm:$0xff] %vm113, %v105
  %115 = vst.msk [vmem:[%s3 + $0x8] sm:$0xff] %vm113, %v110
  // Predicated region
  $region14: #{_lambda_.10} parent=0 // pred_check
    _
  $region15: #{_lambda_.10} parent=0 // pred_check_branch
    %117 = sbr.rel (0) target = $region17
  $region16: #{_lambda_.10} parent=0 // pred_region
    _
  $region17: #{_lambda_.10} parent=0 // pred_fallthru
    _
  // Predicated region
  $region18: #{_lambda_.10} parent=0 // pred_check
    _
  $region19: #{_lambda_.10} parent=0 // pred_check_branch
    %119 = sbr.rel (0) target = $region21
  $region20: #{_lambda_.10} parent=0 // pred_region
    _
  $region21: #{_lambda_.10} parent=0 // pred_fallthru
    _

// kernel: _lambda_.9
$region0: #{_lambda_.9}
  #allocation0 [shape = 'u32[]', space=smem, size = 0x4, offset = 0x4, fixed_abs, tag = 'smem constant byte address 0x4 - core index']
  #allocation1 [shape = 'u32[144,128]{1,0:T(1,128)}', space=vmem, size = 0x12000, scoped, tag = 'internal scratch']
  %s0 = inlined_call_operand.vmem [shape: f32[2,64], index: 0, kind: input, shape index: {}]
  %s1 = inlined_call_operand.vmem [shape: f32[64,32], index: 1, kind: input, shape index: {}]
  %s2 = inlined_call_operand.vmem [shape: f32[1,32], index: 2, kind: input, shape index: {}]
  %s3 = inlined_call_operand.vmem [shape: f32[2,32], index: 3, kind: output, shape index: {}]
  %s4 = sld [smem:[#allocation0]]
  $region22: #{_lambda_.9} parent=0
    _
  %s6 = ssub.s32 1, %s4
  %s7 = scalar_select 0, %s6, %s4
  // Predicated region
  $region2: #{_lambda_.9} parent=0 // pred_check
    _
  $region3: #{_lambda_.9} parent=0 // pred_check_branch
    %9 = sbr.rel (0) target = $region5
  $region4: #{_lambda_.9} parent=0 // pred_region
    _
  $region5: #{_lambda_.9} parent=0 // pred_fallthru
    _
  // Predicated region
  $region6: #{_lambda_.9} parent=0 // pred_check
    _
  $region7: #{_lambda_.9} parent=0 // pred_check_branch
    %11 = sbr.rel (0) target = $region9
  $region8: #{_lambda_.9} parent=0 // pred_region
    _
  $region9: #{_lambda_.9} parent=0 // pred_fallthru
    _
  // Predicated region
  $region10: #{_lambda_.9} parent=0 // pred_check
    _
  $region11: #{_lambda_.9} parent=0 // pred_check_branch
    %13 = sbr.rel (0) target = $region13
  $region12: #{_lambda_.9} parent=0 // pred_region
    _
  $region13: #{_lambda_.9} parent=0 // pred_fallthru
    _
  %v14 = vld [vmem:[%s0] sm:$0x3]
  %v15 = vld [vmem:[%s1] sm:$0xff]
  %v16 = vld [vmem:[%s1 + $0x8] sm:$0xff]
  %v17 = vld [vmem:[%s1 + $0x10] sm:$0xff]
  %v18 = vld [vmem:[%s1 + $0x18] sm:$0xff]
  %v19 = vld [vmem:[%s1 + $0x20] sm:$0xff]
  %v20 = vld [vmem:[%s1 + $0x28] sm:$0xff]
  %v21 = vld [vmem:[%s1 + $0x30] sm:$0xff]
  %v22 = vld [vmem:[%s1 + $0x38] sm:$0xff]
  %v23 = vld [vmem:[%s2] sm:$0x1]
  %v25 = vlaneseq
  %v26 = vshrl.u32 %v25, 7
  %v27 = vsub.s32 0, %v26
  %v28 = vrot.slane %v23, %v27
  %vm30 = vcmask 523264
  %v32 = vsel %vm30, %v14, 0
  %34 = vmatprep.subr.mxu0 0.0
  %35 = vmatpush1.msra.mxu0 0.0
  %36 = vmatprep.subr.mxu0 0.0
  %37 = vmatpush1.msra.mxu0 0.0
  %38 = vmatprep.subr.mxu0 0.0
  %39 = vmatpush1.msra.mxu0 0.0
  %40 = vmatprep.subr.mxu0 0.0
  %41 = vmatpush1.msra.mxu0 0.0
  %42 = vmatprep.subr.mxu0 0.0
  %43 = vmatpush1.msra.mxu0 0.0
  %44 = vmatprep.subr.mxu0 0.0
  %45 = vmatpush1.msra.mxu0 0.0
  %46 = vmatprep.subr.mxu0 0.0
  %47 = vmatpush1.msra.mxu0 0.0
  %48 = vmatprep.subr.mxu0 0.0
  %49 = vmatpush1.msra.mxu0 0.0
  %50 = vmatprep.subr.mxu0 0.0
  %51 = vmatpush1.msra.mxu0 %v22
  %52 = vmatprep.subr.mxu0 0.0
  %53 = vmatpush1.msra.mxu0 %v21
  %54 = vmatprep.subr.mxu0 0.0
  %55 = vmatpush1.msra.mxu0 %v20
  %56 = vmatprep.subr.mxu0 0.0
  %57 = vmatpush1.msra.mxu0 %v19
  %58 = vmatprep.subr.mxu0 0.0
  %59 = vmatpush1.msra.mxu0 %v18
  %60 = vmatprep.subr.mxu0 0.0
  %61 = vmatpush1.msra.mxu0 %v17
  %62 = vmatprep.subr.mxu0 0.0
  %63 = vmatpush1.msra.mxu0 %v16
  %64 = vmatprep.subr.mxu0 0.0
  %65 = vmatpush1.msra.mxu0 %v15
  %66 = vmatprep.subr.mxu0 0.0
  %67 = vmatpush2.msra.mxu0 0.0
  %68 = vmatprep.subr.mxu0 0.0
  %69 = vmatpush2.msra.mxu0 0.0
  %70 = vmatprep.subr.mxu0 0.0
  %71 = vmatpush2.msra.mxu0 0.0
  %72 = vmatprep.subr.mxu0 0.0
  %73 = vmatpush2.msra.mxu0 0.0
  %74 = vmatprep.subr.mxu0 0.0
  %75 = vmatpush2.msra.mxu0 0.0
  %76 = vmatprep.subr.mxu0 0.0
  %77 = vmatpush2.msra.mxu0 0.0
  %78 = vmatprep.subr.mxu0 0.0
  %79 = vmatpush2.msra.mxu0 0.0
  %80 = vmatprep.subr.mxu0 0.0
  %81 = vmatpush2.msra.mxu0 0.0
  %82 = vmatprep.subr.mxu0 0.0
  %83 = vmatpush2.msra.mxu0 0.0
  %84 = vmatprep.subr.mxu0 0.0
  %85 = vmatpush2.msra.mxu0 0.0
  %86 = vmatprep.subr.mxu0 0.0
  %87 = vmatpush2.msra.mxu0 0.0
  %88 = vmatprep.subr.mxu0 0.0
  %89 = vmatpush2.msra.mxu0 0.0
  %90 = vmatprep.subr.mxu0 0.0
  %91 = vmatpush2.msra.mxu0 0.0
  %92 = vmatprep.subr.mxu0 0.0
  %93 = vmatpush2.msra.mxu0 0.0
  %94 = vmatprep.subr.mxu0 0.0
  %95 = vmatpush2.msra.mxu0 0.0
  %96 = vmatprep.subr.mxu0 0.0
  %97 = vmatpush2.msra.mxu0 0.0
  %98 = vmatprep.mubr.f32.mxu0 0.0
  %99 = vmatmul.mubr.f32.gmra.mxu0 %v32
  %v100 = vpop.f32.mrf.mxu0
  %v101 = vadd.f32 %v28, %v100
  %v102 = vpop.f32.mrf.mxu0
  %103 = vdwg.mxu0
  %v104 = vtanh.pop %v101
  %vm105 = vcmask 254976
  %106 = vst.msk [vmem:[%s3] sm:$0x3] %vm105, %v104
  // Predicated region
  $region14: #{_lambda_.9} parent=0 // pred_check
    _
  $region15: #{_lambda_.9} parent=0 // pred_check_branch
    %108 = sbr.rel (0) target = $region17
  $region16: #{_lambda_.9} parent=0 // pred_region
    _
  $region17: #{_lambda_.9} parent=0 // pred_fallthru
    _
  // Predicated region
  $region18: #{_lambda_.9} parent=0 // pred_check
    _
  $region19: #{_lambda_.9} parent=0 // pred_check_branch
    %110 = sbr.rel (0) target = $region21
  $region20: #{_lambda_.9} parent=0 // pred_region
    _
  $region21: #{_lambda_.9} parent=0 // pred_fallthru
    _

// kernel: _lambda_.8
$region0: #{_lambda_.8}
  #allocation0 [shape = 'u32[]', space=smem, size = 0x4, offset = 0x4, fixed_abs, tag = 'smem constant byte address 0x4 - core index']
  #allocation1 [shape = 'u32[144,128]{1,0:T(1,128)}', space=vmem, size = 0x12000, scoped, tag = 'internal scratch']
  #allocation2 [shape = 'f32[2,32]{1,0:T(2,128)}', space=vmem, size = 0x400, scoped, tag = 'scratch operand']
  #allocation3 [shape = 'f32[2,32]{1,0:T(2,128)}', space=vmem, size = 0x400, scoped, tag = 'scratch operand']
  %s0 = inlined_call_operand.vmem [shape: f32[8,2,96], index: 0, kind: input, shape index: {}]
  %s1 = inlined_call_operand.vmem [shape: f32[8,2,96], index: 1, kind: input, shape index: {}]
  %s2 = inlined_call_operand.vmem [shape: f32[32,96], index: 2, kind: input, shape index: {}]
  %s3 = inlined_call_operand.vmem [shape: f32[1,96], index: 3, kind: input, shape index: {}]
  %s4 = inlined_call_operand.vmem [shape: f32[32,96], index: 4, kind: input, shape index: {}]
  %s5 = inlined_call_operand.vmem [shape: f32[1,96], index: 5, kind: input, shape index: {}]
  %s6 = inlined_call_operand.vmem [shape: f32[8,2,32], index: 6, kind: output, shape index: {0}]
  %s7 = inlined_call_operand.vmem [shape: f32[8,2,32], index: 7, kind: output, shape index: {1}]
  %8 = xla_tuple %s6, %s7
  %s9 = sld [smem:[#allocation0]]
  $region69: #{_lambda_.8} parent=0
    _
  %s11 = ssub.s32 1, %s9
  %s12 = scalar_select 0, %s11, %s9
  loop: start=0, step=1, limit=10
  $region2: #{_lambda_.8} parent=0 // loop_pre_header
    _
  $region3: #{_lambda_.8} parent=0 // loop_header
    %s14 = sphi 0, %s18
    %p15 = scmp.ge.s32.totalorder %s14, 10
    %s24 = sphi 0, %s26
    %s27 = sphi 0, %s24
    %s28 = sphi 0, %s27
    %s44 = sphi 0, %s28
    %s52 = sphi 0, %s54
    %s55 = sphi 0, %s52
    %s56 = sphi 0, %s55
    %s72 = sphi 0, %s56
    %s76 = sphi 0, %s76
    %s78 = sphi 0, %s76
    %s79 = sphi 0, %s78
    %s93 = sphi 0, %s79
    %s97 = sphi 0, %s97
    %s99 = sphi 0, %s97
    %s100 = sphi 0, %s99
    %s114 = sphi 0, %s100
    %s118 = sphi 0, %s118
    %s120 = sphi 0, %s118
    %s121 = sphi 0, %s120
    %s135 = sphi 0, %s121
    %s139 = sphi 0, %s139
    %s141 = sphi 0, %s139
    %s142 = sphi 0, %s141
    %s156 = sphi 0, %s142
    %s162 = sphi 0, %s164
    %s165 = sphi 0, %s162
    %s166 = sphi 0, %s165
    %s182 = sphi 0, %s166
    %s190 = sphi 0, %s192
    %s193 = sphi 0, %s190
    %s194 = sphi 0, %s193
    %s210 = sphi 0, %s194
  $region4: #{_lambda_.8} parent=0 // loop_header_branch
    %17 = sbr.rel (%p15) target = $region8
  $region5: #{_lambda_.8} parent=0 // loop_body
    %s19 = ssub.s32 %s14, 1
    %s20 = ssub.s32 %s14, 2
    %s21 = sadd.s32 %s14, 1
    %s22 = ssub.s32 %s14, %s21
    %p23 = scmp.eq.s32.totalorder %s22, 0
    %s25 = sadd.s32 %s24, 1
    %s26 = scalar_select %p23, %s24, %s25
    %p29 = pneg %p23
    %p30 = scmp.eq.s32.totalorder %s14, 7
    %p31 = por %p29, %p30
    %p32 = scmp.ne.s32.totalorder %s24, %s27
    %p33 = scmp.eq.s32.totalorder %s14, 0
    %p34 = por %p32, %p33
    %p35 = scmp.ne.s32.totalorder %s24, %s27
    %p36 = scmp.eq.s32.totalorder %s19, 7
    %p37 = por %p35, %p36
    %p38 = scmp.ne.s32.totalorder %s27, %s28
    %p39 = scmp.eq.s32.totalorder %s19, 0
    %p40 = por %p38, %p39
    %p41 = scmp.ne.s32.totalorder %s27, %s28
    %p42 = scmp.eq.s32.totalorder %s20, 7
    %p43 = por %p41, %p42
    %p45 = scmp.ne.s32.totalorder %s28, %s44
    %p46 = scmp.eq.s32.totalorder %s20, 0
    %p47 = por %p45, %p46
    %s48 = ssub.s32 7, %s14
    %s49 = ssub.s32 7, %s21
    %s50 = ssub.s32 %s48, %s49
    %p51 = scmp.eq.s32.totalorder %s50, 0
    %s53 = sadd.s32 %s52, 1
    %s54 = scalar_select %p51, %s52, %s53
    %p57 = pneg %p51
    %p58 = scmp.eq.s32.totalorder %s14, 7
    %p59 = por %p57, %p58
    %p60 = scmp.ne.s32.totalorder %s52, %s55
    %p61 = scmp.eq.s32.totalorder %s14, 0
    %p62 = por %p60, %p61
    %p63 = scmp.ne.s32.totalorder %s52, %s55
    %p64 = scmp.eq.s32.totalorder %s19, 7
    %p65 = por %p63, %p64
    %p66 = scmp.ne.s32.totalorder %s55, %s56
    %p67 = scmp.eq.s32.totalorder %s19, 0
    %p68 = por %p66, %p67
    %p69 = scmp.ne.s32.totalorder %s55, %s56
    %p70 = scmp.eq.s32.totalorder %s20, 7
    %p71 = por %p69, %p70
    %p73 = scmp.ne.s32.totalorder %s56, %s72
    %p74 = scmp.eq.s32.totalorder %s20, 0
    %p75 = por %p73, %p74
    %s77 = sadd.s32 %s76, 1
    %p80 = scmp.eq.s32.totalorder %s14, 7
    %p81 = scmp.ne.s32.totalorder %s76, %s78
    %p82 = scmp.eq.s32.totalorder %s14, 0
    %p83 = por %p81, %p82
    %p84 = scmp.ne.s32.totalorder %s76, %s78
    %p85 = scmp.eq.s32.totalorder %s19, 7
    %p86 = por %p84, %p85
    %p87 = scmp.ne.s32.totalorder %s78, %s79
    %p88 = scmp.eq.s32.totalorder %s19, 0
    %p89 = por %p87, %p88
    %p90 = scmp.ne.s32.totalorder %s78, %s79
    %p91 = scmp.eq.s32.totalorder %s20, 7
    %p92 = por %p90, %p91
    %p94 = scmp.ne.s32.totalorder %s79, %s93
    %p95 = scmp.eq.s32.totalorder %s20, 0
    %p96 = por %p94, %p95
    %s98 = sadd.s32 %s97, 1
    %p101 = scmp.eq.s32.totalorder %s14, 7
    %p102 = scmp.ne.s32.totalorder %s97, %s99
    %p103 = scmp.eq.s32.totalorder %s14, 0
    %p104 = por %p102, %p103
    %p105 = scmp.ne.s32.totalorder %s97, %s99
    %p106 = scmp.eq.s32.totalorder %s19, 7
    %p107 = por %p105, %p106
    %p108 = scmp.ne.s32.totalorder %s99, %s100
    %p109 = scmp.eq.s32.totalorder %s19, 0
    %p110 = por %p108, %p109
    %p111 = scmp.ne.s32.totalorder %s99, %s100
    %p112 = scmp.eq.s32.totalorder %s20, 7
    %p113 = por %p111, %p112
    %p115 = scmp.ne.s32.totalorder %s100, %s114
    %p116 = scmp.eq.s32.totalorder %s20, 0
    %p117 = por %p115, %p116
    %s119 = sadd.s32 %s118, 1
    %p122 = scmp.eq.s32.totalorder %s14, 7
    %p123 = scmp.ne.s32.totalorder %s118, %s120
    %p124 = scmp.eq.s32.totalorder %s14, 0
    %p125 = por %p123, %p124
    %p126 = scmp.ne.s32.totalorder %s118, %s120
    %p127 = scmp.eq.s32.totalorder %s19, 7
    %p128 = por %p126, %p127
    %p129 = scmp.ne.s32.totalorder %s120, %s121
    %p130 = scmp.eq.s32.totalorder %s19, 0
    %p131 = por %p129, %p130
    %p132 = scmp.ne.s32.totalorder %s120, %s121
    %p133 = scmp.eq.s32.totalorder %s20, 7
    %p134 = por %p132, %p133
    %p136 = scmp.ne.s32.totalorder %s121, %s135
    %p137 = scmp.eq.s32.totalorder %s20, 0
    %p138 = por %p136, %p137
    %s140 = sadd.s32 %s139, 1
    %p143 = scmp.eq.s32.totalorder %s14, 7
    %p144 = scmp.ne.s32.totalorder %s139, %s141
    %p145 = scmp.eq.s32.totalorder %s14, 0
    %p146 = por %p144, %p145
    %p147 = scmp.ne.s32.totalorder %s139, %s141
    %p148 = scmp.eq.s32.totalorder %s19, 7
    %p149 = por %p147, %p148
    %p150 = scmp.ne.s32.totalorder %s141, %s142
    %p151 = scmp.eq.s32.totalorder %s19, 0
    %p152 = por %p150, %p151
    %p153 = scmp.ne.s32.totalorder %s141, %s142
    %p154 = scmp.eq.s32.totalorder %s20, 7
    %p155 = por %p153, %p154
    %p157 = scmp.ne.s32.totalorder %s142, %s156
    %p158 = scmp.eq.s32.totalorder %s20, 0
    %p159 = por %p157, %p158
    %s160 = ssub.s32 %s14, %s21
    %p161 = scmp.eq.s32.totalorder %s160, 0
    %s163 = sadd.s32 %s162, 1
    %s164 = scalar_select %p161, %s162, %s163
    %p167 = pneg %p161
    %p168 = scmp.eq.s32.totalorder %s14, 7
    %p169 = por %p167, %p168
    %p170 = scmp.ne.s32.totalorder %s162, %s165
    %p171 = scmp.eq.s32.totalorder %s14, 0
    %p172 = por %p170, %p171
    %p173 = scmp.ne.s32.totalorder %s162, %s165
    %p174 = scmp.eq.s32.totalorder %s19, 7
    %p175 = por %p173, %p174
    %p176 = scmp.ne.s32.totalorder %s165, %s166
    %p177 = scmp.eq.s32.totalorder %s19, 0
    %p178 = por %p176, %p177
    %p179 = scmp.ne.s32.totalorder %s165, %s166
    %p180 = scmp.eq.s32.totalorder %s20, 7
    %p181 = por %p179, %p180
    %p183 = scmp.ne.s32.totalorder %s166, %s182
    %p184 = scmp.eq.s32.totalorder %s20, 0
    %p185 = por %p183, %p184
    %s186 = ssub.s32 7, %s14
    %s187 = ssub.s32 7, %s21
    %s188 = ssub.s32 %s186, %s187
    %p189 = scmp.eq.s32.totalorder %s188, 0
    %s191 = sadd.s32 %s190, 1
    %s192 = scalar_select %p189, %s190, %s191
    %p195 = pneg %p189
    %p196 = scmp.eq.s32.totalorder %s14, 7
    %p197 = por %p195, %p196
    %p198 = scmp.ne.s32.totalorder %s190, %s193
    %p199 = scmp.eq.s32.totalorder %s14, 0
    %p200 = por %p198, %p199
    %p201 = scmp.ne.s32.totalorder %s190, %s193
    %p202 = scmp.eq.s32.totalorder %s19, 7
    %p203 = por %p201, %p202
    %p204 = scmp.ne.s32.totalorder %s193, %s194
    %p205 = scmp.eq.s32.totalorder %s19, 0
    %p206 = por %p204, %p205
    %p207 = scmp.ne.s32.totalorder %s193, %s194
    %p208 = scmp.eq.s32.totalorder %s20, 7
    %p209 = por %p207, %p208
    %p211 = scmp.ne.s32.totalorder %s194, %s210
    %p212 = scmp.eq.s32.totalorder %s20, 0
    %p213 = por %p211, %p212
    %p214 = scmp.le.s32.totalorder 1, %s14
    %p215 = scmp.lt.s32.totalorder %s14, 9
    %p216 = pnand %p214, %p215
    %p217 = pneg %p216
    // Predicated region
    $region9: #{_lambda_.8} parent=5 // pred_check
      _
    $region10: #{_lambda_.8} parent=5 // pred_check_branch
      %219 = sbr.rel (%p216) target = $region12
    $region11: #{_lambda_.8} parent=5 // pred_region
      %s220 = ssub.s32 %s14, 1
      // Predicated region
      $region13: #{_lambda_.8} parent=11 // pred_check
        %p221 = pneg %p89
      $region14: #{_lambda_.8} parent=11 // pred_check_branch
        %223 = sbr.rel (%p221) target = $region16
      $region15: #{_lambda_.8} parent=11 // pred_region
        _
      $region16: #{_lambda_.8} parent=11 // pred_fallthru
        _
      // Predicated region
      $region17: #{_lambda_.8} parent=11 // pred_check
        %p224 = pneg %p110
      $region18: #{_lambda_.8} parent=11 // pred_check_branch
        %226 = sbr.rel (%p224) target = $region20
      $region19: #{_lambda_.8} parent=11 // pred_region
        _
      $region20: #{_lambda_.8} parent=11 // pred_fallthru
        _
      // Predicated region
      $region21: #{_lambda_.8} parent=11 // pred_check
        %p227 = pneg %p131
      $region22: #{_lambda_.8} parent=11 // pred_check_branch
        %229 = sbr.rel (%p227) target = $region24
      $region23: #{_lambda_.8} parent=11 // pred_region
        _
      $region24: #{_lambda_.8} parent=11 // pred_fallthru
        _
      // Predicated region
      $region25: #{_lambda_.8} parent=11 // pred_check
        %p230 = pneg %p152
      $region26: #{_lambda_.8} parent=11 // pred_check_branch
        %232 = sbr.rel (%p230) target = $region28
      $region27: #{_lambda_.8} parent=11 // pred_region
        _
      $region28: #{_lambda_.8} parent=11 // pred_fallthru
        _
    $region12: #{_lambda_.8} parent=5 // pred_fallthru
      _
    %p233 = scmp.lt.s32.totalorder %s14, 8
    // Predicated region
    $region29: #{_lambda_.8} parent=5 // pred_check
      %p234 = pneg %p233
    $region30: #{_lambda_.8} parent=5 // pred_check_branch
      %236 = sbr.rel (%p234) target = $region32
    $region31: #{_lambda_.8} parent=5 // pred_region
      // Predicated region
      $region33: #{_lambda_.8} parent=31 // pred_check
        %p237 = pneg %p34
      $region34: #{_lambda_.8} parent=31 // pred_check_branch
        %239 = sbr.rel (%p237) target = $region36
      $region35: #{_lambda_.8} parent=31 // pred_region
        %p240 = scmp.lt.s32.totalorder %s14, 7
        %s241 = scalar_select %p240, %s14, 7
        %s242 = smul.addr %s241, 2
        %s243 = scalar_lea.vmem %s0, %s242
      $region36: #{_lambda_.8} parent=31 // pred_fallthru
        _
      // Predicated region
      $region37: #{_lambda_.8} parent=31 // pred_check
        %p244 = pneg %p62
      $region38: #{_lambda_.8} parent=31 // pred_check_branch
        %246 = sbr.rel (%p244) target = $region40
      $region39: #{_lambda_.8} parent=31 // pred_region
        %s247 = ssub.s32 7, %s14
        %p248 = scmp.lt.s32.totalorder %s247, 7
        %s249 = scalar_select %p248, %s247, 7
        %s250 = smul.addr %s249, 2
        %s251 = scalar_lea.vmem %s1, %s250
        %s252 = ssub.s32 7, %s14
      $region40: #{_lambda_.8} parent=31 // pred_fallthru
        _
    $region32: #{_lambda_.8} parent=5 // pred_fallthru
      _
    %p253 = scmp.le.s32.totalorder 1, %s14
    %p254 = scmp.lt.s32.totalorder %s14, 9
    %p255 = pnand %p253, %p254
    %p256 = pneg %p255
    // Predicated region
    $region41: #{_lambda_.8} parent=5 // pred_check
      _
    $region42: #{_lambda_.8} parent=5 // pred_check_branch
      %258 = sbr.rel (%p255) target = $region44
    $region43: #{_lambda_.8} parent=5 // pred_region
      %s259 = ssub.s32 %s14, 1
      %p260 = scmp.lt.s32.totalorder %s19, 7
      %s261 = scalar_select %p260, %s19, 7
      %s262 = smul.addr %s261, 2
      %s263 = scalar_lea.vmem %s0, %s262
      %p264 = pneg %p40
      %p265 = pneg %p37
      %s266 = ssub.s32 7, %s19
      %p267 = scmp.lt.s32.totalorder %s266, 7
      %s268 = scalar_select %p267, %s266, 7
      %s269 = smul.addr %s268, 2
      %s270 = scalar_lea.vmem %s1, %s269
      %p271 = pneg %p68
      %p272 = pneg %p65
      %p273 = pneg %p89
      %p274 = pneg %p86
      %p275 = pneg %p110
      %p276 = pneg %p107
      %p277 = pneg %p131
      %p278 = pneg %p128
      %p279 = pneg %p152
      %p280 = pneg %p149
      %p281 = pneg %p178
      %p282 = pneg %p175
      %p283 = scmp.lt.s32.totalorder %s19, 7
      %s284 = scalar_select %p283, %s19, 7
      %s285 = smul.addr %s284, 2
      %s286 = scalar_lea.vmem %s6, %s285
      %p287 = pneg %p206
      %p288 = pneg %p203
      %s289 = ssub.s32 7, %s19
      %p290 = scmp.lt.s32.totalorder %s289, 7
      %s291 = scalar_select %p290, %s289, 7
      %s292 = smul.addr %s291, 2
      %s293 = scalar_lea.vmem %s7, %s292
      %p294 = scmp.lt.s32.totalorder %s19, 7
      %s295 = scalar_select %p294, %s19, 7
      %s296 = smul.addr %s295, 2
      %s297 = scalar_lea.vmem %s0, %s296
      %s298 = ssub.s32 7, %s19
      %p299 = scmp.lt.s32.totalorder %s298, 7
      %s300 = scalar_select %p299, %s298, 7
      %s301 = smul.addr %s300, 2
      %s302 = scalar_lea.vmem %s1, %s301
      %s303 = ssub.s32 7, %s19
      %p304 = scmp.lt.s32.totalorder %s19, 7
      %s305 = scalar_select %p304, %s19, 7
      %s306 = smul.addr %s305, 2
      %s307 = scalar_lea.vmem %s6, %s306
      %s308 = ssub.s32 7, %s19
      %p309 = scmp.lt.s32.totalorder %s308, 7
      %s310 = scalar_select %p309, %s308, 7
      %s311 = smul.addr %s310, 2
      %s312 = scalar_lea.vmem %s7, %s311
      %s313 = ssub.s32 7, %s19
      %p314 = scmp.eq.s32.totalorder %s19, 0
      // Predicated region
      $region45: #{_lambda_.8} parent=43 // pred_check
        %p315 = pneg %p314
      $region46: #{_lambda_.8} parent=43 // pred_check_branch
        %317 = sbr.rel (%p315) target = $region48
      $region47: #{_lambda_.8} parent=43 // pred_region
        %vm318 = vcmask 254976
        %319 = vst.msk [vmem:[#allocation2] sm:$0x3] %vm318, 0.0
        %320 = vst.msk [vmem:[#allocation3] sm:$0x3] %vm318, 0.0
      $region48: #{_lambda_.8} parent=43 // pred_fallthru
        _
      %v321 = vld [vmem:[%s297] sm:$0x3]
      %v322 = vld [vmem:[#allocation2] sm:$0x3]
      %v323 = vld [vmem:[%s2] sm:$0xff]
      %v324 = vld [vmem:[%s2 + $0x8] sm:$0xff]
      %v325 = vld [vmem:[%s2 + $0x10] sm:$0xff]
      %v326 = vld [vmem:[%s2 + $0x18] sm:$0xff]
      %v327 = vld [vmem:[%s3] sm:$0x1]
      %v329 = vlaneseq
      %v330 = vshrl.u32 %v329, 7
      %v331 = vsub.s32 0, %v330
      %v332 = vrot.slane %v327, %v331
      %vm334 = vcmask 261120
      %v336 = vsel %vm334, %v322, 0
      %338 = vmatprep.subr.mxu0 0.0
      %339 = vmatpush1.msra.mxu0 0.0
      %340 = vmatprep.subr.mxu0 0.0
      %341 = vmatpush1.msra.mxu0 0.0
      %342 = vmatprep.subr.mxu0 0.0
      %343 = vmatpush1.msra.mxu0 0.0
      %344 = vmatprep.subr.mxu0 0.0
      %345 = vmatpush1.msra.mxu0 0.0
      %346 = vmatprep.subr.mxu0 0.0
      %347 = vmatpush1.msra.mxu0 0.0
      %348 = vmatprep.subr.mxu0 0.0
      %349 = vmatpush1.msra.mxu0 0.0
      %350 = vmatprep.subr.mxu0 0.0
      %351 = vmatpush1.msra.mxu0 0.0
      %352 = vmatprep.subr.mxu0 0.0
      %353 = vmatpush1.msra.mxu0 0.0
      %354 = vmatprep.subr.mxu0 0.0
      %355 = vmatpush1.msra.mxu0 0.0
      %356 = vmatprep.subr.mxu0 0.0
      %357 = vmatpush1.msra.mxu0 0.0
      %358 = vmatprep.subr.mxu0 0.0
      %359 = vmatpush1.msra.mxu0 0.0
      %360 = vmatprep.subr.mxu0 0.0
      %361 = vmatpush1.msra.mxu0 0.0
      %362 = vmatprep.subr.mxu0 0.0
      %363 = vmatpush1.msra.mxu0 %v326
      %364 = vmatprep.subr.mxu0 0.0
      %365 = vmatpush1.msra.mxu0 %v325
      %366 = vmatprep.subr.mxu0 0.0
      %367 = vmatpush1.msra.mxu0 %v324
      %368 = vmatprep.subr.mxu0 0.0
      %369 = vmatpush1.msra.mxu0 %v323
      %370 = vmatprep.subr.mxu0 0.0
      %371 = vmatpush2.msra.mxu0 0.0
      %372 = vmatprep.subr.mxu0 0.0
      %373 = vmatpush2.msra.mxu0 0.0
      %374 = vmatprep.subr.mxu0 0.0
      %375 = vmatpush2.msra.mxu0 0.0
      %376 = vmatprep.subr.mxu0 0.0
      %377 = vmatpush2.msra.mxu0 0.0
      %378 = vmatprep.subr.mxu0 0.0
      %379 = vmatpush2.msra.mxu0 0.0
      %380 = vmatprep.subr.mxu0 0.0
      %381 = vmatpush2.msra.mxu0 0.0
      %382 = vmatprep.subr.mxu0 0.0
      %383 = vmatpush2.msra.mxu0 0.0
      %384 = vmatprep.subr.mxu0 0.0
      %385 = vmatpush2.msra.mxu0 0.0
      %386 = vmatprep.subr.mxu0 0.0
      %387 = vmatpush2.msra.mxu0 0.0
      %388 = vmatprep.subr.mxu0 0.0
      %389 = vmatpush2.msra.mxu0 0.0
      %390 = vmatprep.subr.mxu0 0.0
      %391 = vmatpush2.msra.mxu0 0.0
      %392 = vmatprep.subr.mxu0 0.0
      %393 = vmatpush2.msra.mxu0 0.0
      %394 = vmatprep.subr.mxu0 0.0
      %395 = vmatpush2.msra.mxu0 0.0
      %396 = vmatprep.subr.mxu0 0.0
      %397 = vmatpush2.msra.mxu0 0.0
      %398 = vmatprep.subr.mxu0 0.0
      %399 = vmatpush2.msra.mxu0 0.0
      %400 = vmatprep.subr.mxu0 0.0
      %401 = vmatpush2.msra.mxu0 0.0
      %402 = vmatprep.mubr.f32.mxu0 0.0
      %403 = vmatmul.mubr.f32.gmra.mxu0 %v336
      %v404 = vpop.f32.mrf.mxu0
      %v405 = vadd.f32 %v332, %v404
      %v406 = vpop.f32.mrf.mxu0
      %407 = vdwg.mxu0
      %v408 = vadd.f32 %v321, %v405
      %v409 = vxor.u32 %v408, 2147483648
      %v410 = vmul.f32 %v409, 1.442695
      %v411 = vpow.pop %v410
      %v412 = vadd.f32 %v411, 1.0
      %v413 = vrcp.pop %v412
      %v414 = vmul.f32 1.0, %v413
      %416 = vrot.lane.b32.xlu0 %v405, 64
      %v417 = vpop.permute.xlu0 %416
      %v419 = vmul.f32 %v414, %v417
      %421 = vrot.lane.b32.xlu0 %v419, 64
      %v422 = vpop.permute.xlu0 %421
      %v424 = vadd.f32 %v321, %v422
      %v425 = vtanh.pop %v424
      %v426 = vsub.f32 1.0, %v414
      %428 = vrot.lane.b32.xlu0 %v425, 96
      %v429 = vpop.permute.xlu0 %428
      %v431 = vmul.f32 %v426, %v429
      %432 = vrot.lane.b32.xlu0 %v322, 32
      %v433 = vpop.permute.xlu0 %432
      %v435 = vmul.f32 %v414, %v433
      %v436 = vadd.f32 %v431, %v435
      %438 = vrot.lane.b32.xlu0 %v436, 96
      %v439 = vpop.permute.xlu0 %438
      %vm441 = vcmask 254976
      %442 = vst.msk [vmem:[#allocation2] sm:$0x3] %vm441, %v439
      %443 = vst.msk [vmem:[%s307] sm:$0x3] %vm441, %v439
      %v444 = vld [vmem:[%s302] sm:$0x3]
      %v445 = vld [vmem:[#allocation3] sm:$0x3]
      %v446 = vld [vmem:[%s4] sm:$0xff]
      %v447 = vld [vmem:[%s4 + $0x8] sm:$0xff]
      %v448 = vld [vmem:[%s4 + $0x10] sm:$0xff]
      %v449 = vld [vmem:[%s4 + $0x18] sm:$0xff]
      %v450 = vld [vmem:[%s5] sm:$0x1]
      %v452 = vlaneseq
      %v453 = vshrl.u32 %v452, 7
      %v454 = vsub.s32 0, %v453
      %v455 = vrot.slane %v450, %v454
      %v458 = vsel %vm334, %v445, 0
      %460 = vmatprep.subr.mxu0 0.0
      %461 = vmatpush1.msra.mxu0 0.0
      %462 = vmatprep.subr.mxu0 0.0
      %463 = vmatpush1.msra.mxu0 0.0
      %464 = vmatprep.subr.mxu0 0.0
      %465 = vmatpush1.msra.mxu0 0.0
      %466 = vmatprep.subr.mxu0 0.0
      %467 = vmatpush1.msra.mxu0 0.0
      %468 = vmatprep.subr.mxu0 0.0
      %469 = vmatpush1.msra.mxu0 0.0
      %470 = vmatprep.subr.mxu0 0.0
      %471 = vmatpush1.msra.mxu0 0.0
      %472 = vmatprep.subr.mxu0 0.0
      %473 = vmatpush1.msra.mxu0 0.0
      %474 = vmatprep.subr.mxu0 0.0
      %475 = vmatpush1.msra.mxu0 0.0
      %476 = vmatprep.subr.mxu0 0.0
      %477 = vmatpush1.msra.mxu0 0.0
      %478 = vmatprep.subr.mxu0 0.0
      %479 = vmatpush1.msra.mxu0 0.0
      %480 = vmatprep.subr.mxu0 0.0
      %481 = vmatpush1.msra.mxu0 0.0
      %482 = vmatprep.subr.mxu0 0.0
      %483 = vmatpush1.msra.mxu0 0.0
      %484 = vmatprep.subr.mxu0 0.0
      %485 = vmatpush1.msra.mxu0 %v449
      %486 = vmatprep.subr.mxu0 0.0
      %487 = vmatpush1.msra.mxu0 %v448
      %488 = vmatprep.subr.mxu0 0.0
      %489 = vmatpush1.msra.mxu0 %v447
      %490 = vmatprep.subr.mxu0 0.0
      %491 = vmatpush1.msra.mxu0 %v446
      %492 = vmatprep.subr.mxu0 0.0
      %493 = vmatpush2.msra.mxu0 0.0
      %494 = vmatprep.subr.mxu0 0.0
      %495 = vmatpush2.msra.mxu0 0.0
      %496 = vmatprep.subr.mxu0 0.0
      %497 = vmatpush2.msra.mxu0 0.0
      %498 = vmatprep.subr.mxu0 0.0
      %499 = vmatpush2.msra.mxu0 0.0
      %500 = vmatprep.subr.mxu0 0.0
      %501 = vmatpush2.msra.mxu0 0.0
      %502 = vmatprep.subr.mxu0 0.0
      %503 = vmatpush2.msra.mxu0 0.0
      %504 = vmatprep.subr.mxu0 0.0
      %505 = vmatpush2.msra.mxu0 0.0
      %506 = vmatprep.subr.mxu0 0.0
      %507 = vmatpush2.msra.mxu0 0.0
      %508 = vmatprep.subr.mxu0 0.0
      %509 = vmatpush2.msra.mxu0 0.0
      %510 = vmatprep.subr.mxu0 0.0
      %511 = vmatpush2.msra.mxu0 0.0
      %512 = vmatprep.subr.mxu0 0.0
      %513 = vmatpush2.msra.mxu0 0.0
      %514 = vmatprep.subr.mxu0 0.0
      %515 = vmatpush2.msra.mxu0 0.0
      %516 = vmatprep.subr.mxu0 0.0
      %517 = vmatpush2.msra.mxu0 0.0
      %518 = vmatprep.subr.mxu0 0.0
      %519 = vmatpush2.msra.mxu0 0.0
      %520 = vmatprep.subr.mxu0 0.0
      %521 = vmatpush2.msra.mxu0 0.0
      %522 = vmatprep.subr.mxu0 0.0
      %523 = vmatpush2.msra.mxu0 0.0
      %524 = vmatprep.mubr.f32.mxu0 0.0
      %525 = vmatmul.mubr.f32.gmra.mxu0 %v458
      %v526 = vpop.f32.mrf.mxu0
      %v527 = vadd.f32 %v455, %v526
      %v528 = vpop.f32.mrf.mxu0
      %529 = vdwg.mxu0
      %v530 = vadd.f32 %v444, %v527
      %v531 = vxor.u32 %v530, 2147483648
      %v532 = vmul.f32 %v531, 1.442695
      %v533 = vpow.pop %v532
      %v534 = vadd.f32 %v533, 1.0
      %v535 = vrcp.pop %v534
      %v536 = vmul.f32 1.0, %v535
      %538 = vrot.lane.b32.xlu0 %v527, 64
      %v539 = vpop.permute.xlu0 %538
      %v541 = vmul.f32 %v536, %v539
      %543 = vrot.lane.b32.xlu0 %v541, 64
      %v544 = vpop.permute.xlu0 %543
      %v546 = vadd.f32 %v444, %v544
      %v547 = vtanh.pop %v546
      %v548 = vsub.f32 1.0, %v536
      %550 = vrot.lane.b32.xlu0 %v547, 96
      %v551 = vpop.permute.xlu0 %550
      %v553 = vmul.f32 %v548, %v551
      %554 = vrot.lane.b32.xlu0 %v445, 32
      %v555 = vpop.permute.xlu0 %554
      %v557 = vmul.f32 %v536, %v555
      %v558 = vadd.f32 %v553, %v557
      %560 = vrot.lane.b32.xlu0 %v558, 96
      %v561 = vpop.permute.xlu0 %560
      %563 = vst.msk [vmem:[#allocation3] sm:$0x3] %vm441, %v561
      %564 = vst.msk [vmem:[%s312] sm:$0x3] %vm441, %v561
      %p565 = scmp.lt.s32.totalorder %s19, 7
      %s566 = scalar_select %p565, %s19, 7
      %s567 = smul.addr %s566, 2
      %s568 = scalar_lea.vmem %s6, %s567
      %s569 = ssub.s32 7, %s19
      %p570 = scmp.lt.s32.totalorder %s569, 7
      %s571 = scalar_select %p570, %s569, 7
      %s572 = smul.addr %s571, 2
      %s573 = scalar_lea.vmem %s7, %s572
      // Predicated region
      $region49: #{_lambda_.8} parent=43 // pred_check
        %p574 = pneg %p175
      $region50: #{_lambda_.8} parent=43 // pred_check_branch
        %576 = sbr.rel (%p574) target = $region52
      $region51: #{_lambda_.8} parent=43 // pred_region
        _
      $region52: #{_lambda_.8} parent=43 // pred_fallthru
        _
      // Predicated region
      $region53: #{_lambda_.8} parent=43 // pred_check
        %p577 = pneg %p203
      $region54: #{_lambda_.8} parent=43 // pred_check_branch
        %579 = sbr.rel (%p577) target = $region56
      $region55: #{_lambda_.8} parent=43 // pred_region
        %s580 = ssub.s32 7, %s19
      $region56: #{_lambda_.8} parent=43 // pred_fallthru
        _
    $region44: #{_lambda_.8} parent=5 // pred_fallthru
      _
    %p581 = scmp.le.s32.totalorder 2, %s14
    // Predicated region
    $region57: #{_lambda_.8} parent=5 // pred_check
      %p582 = pneg %p581
    $region58: #{_lambda_.8} parent=5 // pred_check_branch
      %584 = sbr.rel (%p582) target = $region60
    $region59: #{_lambda_.8} parent=5 // pred_region
      %s585 = ssub.s32 %s14, 2
      // Predicated region
      $region61: #{_lambda_.8} parent=59 // pred_check
        %p586 = pneg %p181
      $region62: #{_lambda_.8} parent=59 // pred_check_branch
        %588 = sbr.rel (%p586) target = $region64
      $region63: #{_lambda_.8} parent=59 // pred_region
        %p589 = scmp.lt.s32.totalorder %s20, 7
        %s590 = scalar_select %p589, %s20, 7
        %s591 = smul.addr %s590, 2
        %s592 = scalar_lea.vmem %s6, %s591
      $region64: #{_lambda_.8} parent=59 // pred_fallthru
        _
      // Predicated region
      $region65: #{_lambda_.8} parent=59 // pred_check
        %p593 = pneg %p209
      $region66: #{_lambda_.8} parent=59 // pred_check_branch
        %595 = sbr.rel (%p593) target = $region68
      $region67: #{_lambda_.8} parent=59 // pred_region
        %s596 = ssub.s32 7, %s20
        %p597 = scmp.lt.s32.totalorder %s596, 7
        %s598 = scalar_select %p597, %s596, 7
        %s599 = smul.addr %s598, 2
        %s600 = scalar_lea.vmem %s7, %s599
      $region68: #{_lambda_.8} parent=59 // pred_fallthru
        _
    $region60: #{_lambda_.8} parent=5 // pred_fallthru
      _
  $region6: #{_lambda_.8} parent=0 // loop_footer
    %s18 = sadd.s32 1, %s14
  $region7: #{_lambda_.8} parent=0 // loop_footer_branch
    %13 = sbr.rel target = $region3
  $region8: #{_lambda_.8} parent=0 // loop_exit
    _

// kernel: _lambda_.11
$region0: #{_lambda_.11}
  #allocation0 [shape = 'u32[]', space=smem, size = 0x4, offset = 0x4, fixed_abs, tag = 'smem constant byte address 0x4 - core index']
  #allocation1 [shape = 'u32[144,128]{1,0:T(1,128)}', space=vmem, size = 0x12000, scoped, tag = 'internal scratch']
  #allocation2 [shape = 'f32[2,32]{1,0:T(2,128)}', space=vmem, size = 0x400, scoped, tag = 'scratch operand']
  %s0 = inlined_call_operand.vmem [shape: f32[5,2,16], index: 0, kind: input, shape index: {}]
  %s1 = inlined_call_operand.vmem [shape: f32[2,32], index: 1, kind: input, shape index: {}]
  %s2 = inlined_call_operand.vmem [shape: f32[2,8,64], index: 2, kind: input, shape index: {}]
  %s3 = inlined_call_operand.vmem [shape: f32[2,8,32], index: 3, kind: input, shape index: {}]
  %s4 = inlined_call_operand.vmem [shape: f32[2,8], index: 4, kind: input, shape index: {}]
  %s5 = inlined_call_operand.vmem [shape: f32[32,32], index: 5, kind: input, shape index: {}]
  %s6 = inlined_call_operand.vmem [shape: f32[1,32], index: 6, kind: input, shape index: {}]
  %s7 = inlined_call_operand.vmem [shape: f32[80,96], index: 7, kind: input, shape index: {}]
  %s8 = inlined_call_operand.vmem [shape: f32[32,96], index: 8, kind: input, shape index: {}]
  %s9 = inlined_call_operand.vmem [shape: f32[1,96], index: 9, kind: input, shape index: {}]
  %s10 = inlined_call_operand.vmem [shape: f32[1,96], index: 10, kind: input, shape index: {}]
  %s11 = inlined_call_operand.vmem [shape: f32[112,50], index: 11, kind: input, shape index: {}]
  %s12 = inlined_call_operand.vmem [shape: f32[1,50], index: 12, kind: input, shape index: {}]
  %s13 = inlined_call_operand.vmem [shape: f32[5,2,50], index: 13, kind: output, shape index: {}]
  %s14 = sld [smem:[#allocation0]]
  $region89: #{_lambda_.11} parent=0
    _
  %s16 = ssub.s32 1, %s14
  %s17 = scalar_select 0, %s16, %s14
  loop: start=0, step=1, limit=7
  $region2: #{_lambda_.11} parent=0 // loop_pre_header
    _
  $region3: #{_lambda_.11} parent=0 // loop_header
    %s19 = sphi 0, %s23
    %p20 = scmp.ge.s32.totalorder %s19, 7
    %s29 = sphi 0, %s31
    %s32 = sphi 0, %s29
    %s33 = sphi 0, %s32
    %s49 = sphi 0, %s33
    %s53 = sphi 0, %s53
    %s55 = sphi 0, %s53
    %s56 = sphi 0, %s55
    %s70 = sphi 0, %s56
    %s74 = sphi 0, %s74
    %s76 = sphi 0, %s74
    %s77 = sphi 0, %s76
    %s91 = sphi 0, %s77
    %s95 = sphi 0, %s95
    %s97 = sphi 0, %s95
    %s98 = sphi 0, %s97
    %s112 = sphi 0, %s98
    %s116 = sphi 0, %s116
    %s118 = sphi 0, %s116
    %s119 = sphi 0, %s118
    %s133 = sphi 0, %s119
    %s137 = sphi 0, %s137
    %s139 = sphi 0, %s137
    %s140 = sphi 0, %s139
    %s154 = sphi 0, %s140
    %s158 = sphi 0, %s158
    %s160 = sphi 0, %s158
    %s161 = sphi 0, %s160
    %s175 = sphi 0, %s161
    %s179 = sphi 0, %s179
    %s181 = sphi 0, %s179
    %s182 = sphi 0, %s181
    %s196 = sphi 0, %s182
    %s200 = sphi 0, %s200
    %s202 = sphi 0, %s200
    %s203 = sphi 0, %s202
    %s217 = sphi 0, %s203
    %s221 = sphi 0, %s221
    %s223 = sphi 0, %s221
    %s224 = sphi 0, %s223
    %s238 = sphi 0, %s224
    %s242 = sphi 0, %s242
    %s244 = sphi 0, %s242
    %s245 = sphi 0, %s244
    %s259 = sphi 0, %s245
    %s263 = sphi 0, %s263
    %s265 = sphi 0, %s263
    %s266 = sphi 0, %s265
    %s280 = sphi 0, %s266
    %s284 = sphi 0, %s284
    %s286 = sphi 0, %s284
    %s287 = sphi 0, %s286
    %s301 = sphi 0, %s287
    %s307 = sphi 0, %s309
    %s310 = sphi 0, %s307
    %s311 = sphi 0, %s310
    %s327 = sphi 0, %s311
  $region4: #{_lambda_.11} parent=0 // loop_header_branch
    %22 = sbr.rel (%p20) target = $region8
  $region5: #{_lambda_.11} parent=0 // loop_body
    %s24 = ssub.s32 %s19, 1
    %s25 = ssub.s32 %s19, 2
    %s26 = sadd.s32 %s19, 1
    %s27 = ssub.s32 %s19, %s26
    %p28 = scmp.eq.s32.totalorder %s27, 0
    %s30 = sadd.s32 %s29, 1
    %s31 = scalar_select %p28, %s29, %s30
    %p34 = pneg %p28
    %p35 = scmp.eq.s32.totalorder %s19, 4
    %p36 = por %p34, %p35
    %p37 = scmp.ne.s32.totalorder %s29, %s32
    %p38 = scmp.eq.s32.totalorder %s19, 0
    %p39 = por %p37, %p38
    %p40 = scmp.ne.s32.totalorder %s29, %s32
    %p41 = scmp.eq.s32.totalorder %s24, 4
    %p42 = por %p40, %p41
    %p43 = scmp.ne.s32.totalorder %s32, %s33
    %p44 = scmp.eq.s32.totalorder %s24, 0
    %p45 = por %p43, %p44
    %p46 = scmp.ne.s32.totalorder %s32, %s33
    %p47 = scmp.eq.s32.totalorder %s25, 4
    %p48 = por %p46, %p47
    %p50 = scmp.ne.s32.totalorder %s33, %s49
    %p51 = scmp.eq.s32.totalorder %s25, 0
    %p52 = por %p50, %p51
    %s54 = sadd.s32 %s53, 1
    %p57 = scmp.eq.s32.totalorder %s19, 4
    %p58 = scmp.ne.s32.totalorder %s53, %s55
    %p59 = scmp.eq.s32.totalorder %s19, 0
    %p60 = por %p58, %p59
    %p61 = scmp.ne.s32.totalorder %s53, %s55
    %p62 = scmp.eq.s32.totalorder %s24, 4
    %p63 = por %p61, %p62
    %p64 = scmp.ne.s32.totalorder %s55, %s56
    %p65 = scmp.eq.s32.totalorder %s24, 0
    %p66 = por %p64, %p65
    %p67 = scmp.ne.s32.totalorder %s55, %s56
    %p68 = scmp.eq.s32.totalorder %s25, 4
    %p69 = por %p67, %p68
    %p71 = scmp.ne.s32.totalorder %s56, %s70
    %p72 = scmp.eq.s32.totalorder %s25, 0
    %p73 = por %p71, %p72
    %s75 = sadd.s32 %s74, 1
    %p78 = scmp.eq.s32.totalorder %s19, 4
    %p79 = scmp.ne.s32.totalorder %s74, %s76
    %p80 = scmp.eq.s32.totalorder %s19, 0
    %p81 = por %p79, %p80
    %p82 = scmp.ne.s32.totalorder %s74, %s76
    %p83 = scmp.eq.s32.totalorder %s24, 4
    %p84 = por %p82, %p83
    %p85 = scmp.ne.s32.totalorder %s76, %s77
    %p86 = scmp.eq.s32.totalorder %s24, 0
    %p87 = por %p85, %p86
    %p88 = scmp.ne.s32.totalorder %s76, %s77
    %p89 = scmp.eq.s32.totalorder %s25, 4
    %p90 = por %p88, %p89
    %p92 = scmp.ne.s32.totalorder %s77, %s91
    %p93 = scmp.eq.s32.totalorder %s25, 0
    %p94 = por %p92, %p93
    %s96 = sadd.s32 %s95, 1
    %p99 = scmp.eq.s32.totalorder %s19, 4
    %p100 = scmp.ne.s32.totalorder %s95, %s97
    %p101 = scmp.eq.s32.totalorder %s19, 0
    %p102 = por %p100, %p101
    %p103 = scmp.ne.s32.totalorder %s95, %s97
    %p104 = scmp.eq.s32.totalorder %s24, 4
    %p105 = por %p103, %p104
    %p106 = scmp.ne.s32.totalorder %s97, %s98
    %p107 = scmp.eq.s32.totalorder %s24, 0
    %p108 = por %p106, %p107
    %p109 = scmp.ne.s32.totalorder %s97, %s98
    %p110 = scmp.eq.s32.totalorder %s25, 4
    %p111 = por %p109, %p110
    %p113 = scmp.ne.s32.totalorder %s98, %s112
    %p114 = scmp.eq.s32.totalorder %s25, 0
    %p115 = por %p113, %p114
    %s117 = sadd.s32 %s116, 1
    %p120 = scmp.eq.s32.totalorder %s19, 4
    %p121 = scmp.ne.s32.totalorder %s116, %s118
    %p122 = scmp.eq.s32.totalorder %s19, 0
    %p123 = por %p121, %p122
    %p124 = scmp.ne.s32.totalorder %s116, %s118
    %p125 = scmp.eq.s32.totalorder %s24, 4
    %p126 = por %p124, %p125
    %p127 = scmp.ne.s32.totalorder %s118, %s119
    %p128 = scmp.eq.s32.totalorder %s24, 0
    %p129 = por %p127, %p128
    %p130 = scmp.ne.s32.totalorder %s118, %s119
    %p131 = scmp.eq.s32.totalorder %s25, 4
    %p132 = por %p130, %p131
    %p134 = scmp.ne.s32.totalorder %s119, %s133
    %p135 = scmp.eq.s32.totalorder %s25, 0
    %p136 = por %p134, %p135
    %s138 = sadd.s32 %s137, 1
    %p141 = scmp.eq.s32.totalorder %s19, 4
    %p142 = scmp.ne.s32.totalorder %s137, %s139
    %p143 = scmp.eq.s32.totalorder %s19, 0
    %p144 = por %p142, %p143
    %p145 = scmp.ne.s32.totalorder %s137, %s139
    %p146 = scmp.eq.s32.totalorder %s24, 4
    %p147 = por %p145, %p146
    %p148 = scmp.ne.s32.totalorder %s139, %s140
    %p149 = scmp.eq.s32.totalorder %s24, 0
    %p150 = por %p148, %p149
    %p151 = scmp.ne.s32.totalorder %s139, %s140
    %p152 = scmp.eq.s32.totalorder %s25, 4
    %p153 = por %p151, %p152
    %p155 = scmp.ne.s32.totalorder %s140, %s154
    %p156 = scmp.eq.s32.totalorder %s25, 0
    %p157 = por %p155, %p156
    %s159 = sadd.s32 %s158, 1
    %p162 = scmp.eq.s32.totalorder %s19, 4
    %p163 = scmp.ne.s32.totalorder %s158, %s160
    %p164 = scmp.eq.s32.totalorder %s19, 0
    %p165 = por %p163, %p164
    %p166 = scmp.ne.s32.totalorder %s158, %s160
    %p167 = scmp.eq.s32.totalorder %s24, 4
    %p168 = por %p166, %p167
    %p169 = scmp.ne.s32.totalorder %s160, %s161
    %p170 = scmp.eq.s32.totalorder %s24, 0
    %p171 = por %p169, %p170
    %p172 = scmp.ne.s32.totalorder %s160, %s161
    %p173 = scmp.eq.s32.totalorder %s25, 4
    %p174 = por %p172, %p173
    %p176 = scmp.ne.s32.totalorder %s161, %s175
    %p177 = scmp.eq.s32.totalorder %s25, 0
    %p178 = por %p176, %p177
    %s180 = sadd.s32 %s179, 1
    %p183 = scmp.eq.s32.totalorder %s19, 4
    %p184 = scmp.ne.s32.totalorder %s179, %s181
    %p185 = scmp.eq.s32.totalorder %s19, 0
    %p186 = por %p184, %p185
    %p187 = scmp.ne.s32.totalorder %s179, %s181
    %p188 = scmp.eq.s32.totalorder %s24, 4
    %p189 = por %p187, %p188
    %p190 = scmp.ne.s32.totalorder %s181, %s182
    %p191 = scmp.eq.s32.totalorder %s24, 0
    %p192 = por %p190, %p191
    %p193 = scmp.ne.s32.totalorder %s181, %s182
    %p194 = scmp.eq.s32.totalorder %s25, 4
    %p195 = por %p193, %p194
    %p197 = scmp.ne.s32.totalorder %s182, %s196
    %p198 = scmp.eq.s32.totalorder %s25, 0
    %p199 = por %p197, %p198
    %s201 = sadd.s32 %s200, 1
    %p204 = scmp.eq.s32.totalorder %s19, 4
    %p205 = scmp.ne.s32.totalorder %s200, %s202
    %p206 = scmp.eq.s32.totalorder %s19, 0
    %p207 = por %p205, %p206
    %p208 = scmp.ne.s32.totalorder %s200, %s202
    %p209 = scmp.eq.s32.totalorder %s24, 4
    %p210 = por %p208, %p209
    %p211 = scmp.ne.s32.totalorder %s202, %s203
    %p212 = scmp.eq.s32.totalorder %s24, 0
    %p213 = por %p211, %p212
    %p214 = scmp.ne.s32.totalorder %s202, %s203
    %p215 = scmp.eq.s32.totalorder %s25, 4
    %p216 = por %p214, %p215
    %p218 = scmp.ne.s32.totalorder %s203, %s217
    %p219 = scmp.eq.s32.totalorder %s25, 0
    %p220 = por %p218, %p219
    %s222 = sadd.s32 %s221, 1
    %p225 = scmp.eq.s32.totalorder %s19, 4
    %p226 = scmp.ne.s32.totalorder %s221, %s223
    %p227 = scmp.eq.s32.totalorder %s19, 0
    %p228 = por %p226, %p227
    %p229 = scmp.ne.s32.totalorder %s221, %s223
    %p230 = scmp.eq.s32.totalorder %s24, 4
    %p231 = por %p229, %p230
    %p232 = scmp.ne.s32.totalorder %s223, %s224
    %p233 = scmp.eq.s32.totalorder %s24, 0
    %p234 = por %p232, %p233
    %p235 = scmp.ne.s32.totalorder %s223, %s224
    %p236 = scmp.eq.s32.totalorder %s25, 4
    %p237 = por %p235, %p236
    %p239 = scmp.ne.s32.totalorder %s224, %s238
    %p240 = scmp.eq.s32.totalorder %s25, 0
    %p241 = por %p239, %p240
    %s243 = sadd.s32 %s242, 1
    %p246 = scmp.eq.s32.totalorder %s19, 4
    %p247 = scmp.ne.s32.totalorder %s242, %s244
    %p248 = scmp.eq.s32.totalorder %s19, 0
    %p249 = por %p247, %p248
    %p250 = scmp.ne.s32.totalorder %s242, %s244
    %p251 = scmp.eq.s32.totalorder %s24, 4
    %p252 = por %p250, %p251
    %p253 = scmp.ne.s32.totalorder %s244, %s245
    %p254 = scmp.eq.s32.totalorder %s24, 0
    %p255 = por %p253, %p254
    %p256 = scmp.ne.s32.totalorder %s244, %s245
    %p257 = scmp.eq.s32.totalorder %s25, 4
    %p258 = por %p256, %p257
    %p260 = scmp.ne.s32.totalorder %s245, %s259
    %p261 = scmp.eq.s32.totalorder %s25, 0
    %p262 = por %p260, %p261
    %s264 = sadd.s32 %s263, 1
    %p267 = scmp.eq.s32.totalorder %s19, 4
    %p268 = scmp.ne.s32.totalorder %s263, %s265
    %p269 = scmp.eq.s32.totalorder %s19, 0
    %p270 = por %p268, %p269
    %p271 = scmp.ne.s32.totalorder %s263, %s265
    %p272 = scmp.eq.s32.totalorder %s24, 4
    %p273 = por %p271, %p272
    %p274 = scmp.ne.s32.totalorder %s265, %s266
    %p275 = scmp.eq.s32.totalorder %s24, 0
    %p276 = por %p274, %p275
    %p277 = scmp.ne.s32.totalorder %s265, %s266
    %p278 = scmp.eq.s32.totalorder %s25, 4
    %p279 = por %p277, %p278
    %p281 = scmp.ne.s32.totalorder %s266, %s280
    %p282 = scmp.eq.s32.totalorder %s25, 0
    %p283 = por %p281, %p282
    %s285 = sadd.s32 %s284, 1
    %p288 = scmp.eq.s32.totalorder %s19, 4
    %p289 = scmp.ne.s32.totalorder %s284, %s286
    %p290 = scmp.eq.s32.totalorder %s19, 0
    %p291 = por %p289, %p290
    %p292 = scmp.ne.s32.totalorder %s284, %s286
    %p293 = scmp.eq.s32.totalorder %s24, 4
    %p294 = por %p292, %p293
    %p295 = scmp.ne.s32.totalorder %s286, %s287
    %p296 = scmp.eq.s32.totalorder %s24, 0
    %p297 = por %p295, %p296
    %p298 = scmp.ne.s32.totalorder %s286, %s287
    %p299 = scmp.eq.s32.totalorder %s25, 4
    %p300 = por %p298, %p299
    %p302 = scmp.ne.s32.totalorder %s287, %s301
    %p303 = scmp.eq.s32.totalorder %s25, 0
    %p304 = por %p302, %p303
    %s305 = ssub.s32 %s19, %s26
    %p306 = scmp.eq.s32.totalorder %s305, 0
    %s308 = sadd.s32 %s307, 1
    %s309 = scalar_select %p306, %s307, %s308
    %p312 = pneg %p306
    %p313 = scmp.eq.s32.totalorder %s19, 4
    %p314 = por %p312, %p313
    %p315 = scmp.ne.s32.totalorder %s307, %s310
    %p316 = scmp.eq.s32.totalorder %s19, 0
    %p317 = por %p315, %p316
    %p318 = scmp.ne.s32.totalorder %s307, %s310
    %p319 = scmp.eq.s32.totalorder %s24, 4
    %p320 = por %p318, %p319
    %p321 = scmp.ne.s32.totalorder %s310, %s311
    %p322 = scmp.eq.s32.totalorder %s24, 0
    %p323 = por %p321, %p322
    %p324 = scmp.ne.s32.totalorder %s310, %s311
    %p325 = scmp.eq.s32.totalorder %s25, 4
    %p326 = por %p324, %p325
    %p328 = scmp.ne.s32.totalorder %s311, %s327
    %p329 = scmp.eq.s32.totalorder %s25, 0
    %p330 = por %p328, %p329
    %p331 = scmp.le.s32.totalorder 1, %s19
    %p332 = scmp.lt.s32.totalorder %s19, 6
    %p333 = pnand %p331, %p332
    %p334 = pneg %p333
    // Predicated region
    $region9: #{_lambda_.11} parent=5 // pred_check
      _
    $region10: #{_lambda_.11} parent=5 // pred_check_branch
      %336 = sbr.rel (%p333) target = $region12
    $region11: #{_lambda_.11} parent=5 // pred_region
      %s337 = ssub.s32 %s19, 1
      // Predicated region
      $region13: #{_lambda_.11} parent=11 // pred_check
        %p338 = pneg %p66
      $region14: #{_lambda_.11} parent=11 // pred_check_branch
        %340 = sbr.rel (%p338) target = $region16
      $region15: #{_lambda_.11} parent=11 // pred_region
        _
      $region16: #{_lambda_.11} parent=11 // pred_fallthru
        _
      // Predicated region
      $region17: #{_lambda_.11} parent=11 // pred_check
        %p341 = pneg %p87
      $region18: #{_lambda_.11} parent=11 // pred_check_branch
        %343 = sbr.rel (%p341) target = $region20
      $region19: #{_lambda_.11} parent=11 // pred_region
        _
      $region20: #{_lambda_.11} parent=11 // pred_fallthru
        _
      // Predicated region
      $region21: #{_lambda_.11} parent=11 // pred_check
        %p344 = pneg %p108
      $region22: #{_lambda_.11} parent=11 // pred_check_branch
        %346 = sbr.rel (%p344) target = $region24
      $region23: #{_lambda_.11} parent=11 // pred_region
        _
      $region24: #{_lambda_.11} parent=11 // pred_fallthru
        _
      // Predicated region
      $region25: #{_lambda_.11} parent=11 // pred_check
        %p347 = pneg %p129
      $region26: #{_lambda_.11} parent=11 // pred_check_branch
        %349 = sbr.rel (%p347) target = $region28
      $region27: #{_lambda_.11} parent=11 // pred_region
        _
      $region28: #{_lambda_.11} parent=11 // pred_fallthru
        _
      // Predicated region
      $region29: #{_lambda_.11} parent=11 // pred_check
        %p350 = pneg %p150
      $region30: #{_lambda_.11} parent=11 // pred_check_branch
        %352 = sbr.rel (%p350) target = $region32
      $region31: #{_lambda_.11} parent=11 // pred_region
        _
      $region32: #{_lambda_.11} parent=11 // pred_fallthru
        _
      // Predicated region
      $region33: #{_lambda_.11} parent=11 // pred_check
        %p353 = pneg %p171
      $region34: #{_lambda_.11} parent=11 // pred_check_branch
        %355 = sbr.rel (%p353) target = $region36
      $region35: #{_lambda_.11} parent=11 // pred_region
        _
      $region36: #{_lambda_.11} parent=11 // pred_fallthru
        _
      // Predicated region
      $region37: #{_lambda_.11} parent=11 // pred_check
        %p356 = pneg %p192
      $region38: #{_lambda_.11} parent=11 // pred_check_branch
        %358 = sbr.rel (%p356) target = $region40
      $region39: #{_lambda_.11} parent=11 // pred_region
        _
      $region40: #{_lambda_.11} parent=11 // pred_fallthru
        _
      // Predicated region
      $region41: #{_lambda_.11} parent=11 // pred_check
        %p359 = pneg %p213
      $region42: #{_lambda_.11} parent=11 // pred_check_branch
        %361 = sbr.rel (%p359) target = $region44
      $region43: #{_lambda_.11} parent=11 // pred_region
        _
      $region44: #{_lambda_.11} parent=11 // pred_fallthru
        _
      // Predicated region
      $region45: #{_lambda_.11} parent=11 // pred_check
        %p362 = pneg %p234
      $region46: #{_lambda_.11} parent=11 // pred_check_branch
        %364 = sbr.rel (%p362) target = $region48
      $region47: #{_lambda_.11} parent=11 // pred_region
        _
      $region48: #{_lambda_.11} parent=11 // pred_fallthru
        _
      // Predicated region
      $region49: #{_lambda_.11} parent=11 // pred_check
        %p365 = pneg %p255
      $region50: #{_lambda_.11} parent=11 // pred_check_branch
        %367 = sbr.rel (%p365) target = $region52
      $region51: #{_lambda_.11} parent=11 // pred_region
        _
      $region52: #{_lambda_.11} parent=11 // pred_fallthru
        _
      // Predicated region
      $region53: #{_lambda_.11} parent=11 // pred_check
        %p368 = pneg %p276
      $region54: #{_lambda_.11} parent=11 // pred_check_branch
        %370 = sbr.rel (%p368) target = $region56
      $region55: #{_lambda_.11} parent=11 // pred_region
        _
      $region56: #{_lambda_.11} parent=11 // pred_fallthru
        _
      // Predicated region
      $region57: #{_lambda_.11} parent=11 // pred_check
        %p371 = pneg %p297
      $region58: #{_lambda_.11} parent=11 // pred_check_branch
        %373 = sbr.rel (%p371) target = $region60
      $region59: #{_lambda_.11} parent=11 // pred_region
        _
      $region60: #{_lambda_.11} parent=11 // pred_fallthru
        _
    $region12: #{_lambda_.11} parent=5 // pred_fallthru
      _
    %p374 = scmp.lt.s32.totalorder %s19, 5
    // Predicated region
    $region61: #{_lambda_.11} parent=5 // pred_check
      %p375 = pneg %p374
    $region62: #{_lambda_.11} parent=5 // pred_check_branch
      %377 = sbr.rel (%p375) target = $region64
    $region63: #{_lambda_.11} parent=5 // pred_region
      // Predicated region
      $region65: #{_lambda_.11} parent=63 // pred_check
        %p378 = pneg %p39
      $region66: #{_lambda_.11} parent=63 // pred_check_branch
        %380 = sbr.rel (%p378) target = $region68
      $region67: #{_lambda_.11} parent=63 // pred_region
        %p381 = scmp.lt.s32.totalorder %s19, 4
        %s382 = scalar_select %p381, %s19, 4
        %s383 = smul.addr %s382, 2
        %s384 = scalar_lea.vmem %s0, %s383
      $region68: #{_lambda_.11} parent=63 // pred_fallthru
        _
    $region64: #{_lambda_.11} parent=5 // pred_fallthru
      _
    %p385 = scmp.le.s32.totalorder 1, %s19
    %p386 = scmp.lt.s32.totalorder %s19, 6
    %p387 = pnand %p385, %p386
    %p388 = pneg %p387
    // Predicated region
    $region69: #{_lambda_.11} parent=5 // pred_check
      _
    $region70: #{_lambda_.11} parent=5 // pred_check_branch
      %390 = sbr.rel (%p387) target = $region72
    $region71: #{_lambda_.11} parent=5 // pred_region
      %s391 = ssub.s32 %s19, 1
      %p392 = scmp.lt.s32.totalorder %s24, 4
      %s393 = scalar_select %p392, %s24, 4
      %s394 = smul.addr %s393, 2
      %s395 = scalar_lea.vmem %s0, %s394
      %p396 = pneg %p45
      %p397 = pneg %p42
      %p398 = pneg %p66
      %p399 = pneg %p63
      %p400 = pneg %p87
      %p401 = pneg %p84
      %p402 = pneg %p108
      %p403 = pneg %p105
      %p404 = pneg %p129
      %p405 = pneg %p126
      %p406 = pneg %p150
      %p407 = pneg %p147
      %p408 = pneg %p171
      %p409 = pneg %p168
      %p410 = pneg %p192
      %p411 = pneg %p189
      %p412 = pneg %p213
      %p413 = pneg %p210
      %p414 = pneg %p234
      %p415 = pneg %p231
      %p416 = pneg %p255
      %p417 = pneg %p252
      %p418 = pneg %p276
      %p419 = pneg %p273
      %p420 = pneg %p297
      %p421 = pneg %p294
      %p422 = pneg %p323
      %p423 = pneg %p320
      %p424 = scmp.lt.s32.totalorder %s24, 4
      %s425 = scalar_select %p424, %s24, 4
      %s426 = smul.addr %s425, 2
      %s427 = scalar_lea.vmem %s13, %s426
      %p428 = scmp.lt.s32.totalorder %s24, 4
      %s429 = scalar_select %p428, %s24, 4
      %s430 = smul.addr %s429, 2
      %s431 = scalar_lea.vmem %s0, %s430
      %p432 = scmp.lt.s32.totalorder %s24, 4
      %s433 = scalar_select %p432, %s24, 4
      %s434 = smul.addr %s433, 2
      %s435 = scalar_lea.vmem %s13, %s434
      %p436 = scmp.eq.s32.totalorder %s24, 0
      // Predicated region
      $region73: #{_lambda_.11} parent=71 // pred_check
        %p437 = pneg %p436
      $region74: #{_lambda_.11} parent=71 // pred_check_branch
        %439 = sbr.rel (%p437) target = $region76
      $region75: #{_lambda_.11} parent=71 // pred_region
        %v440 = vld [vmem:[%s1] sm:$0x3]
        %vm441 = vcmask 254976
        %442 = vst.msk [vmem:[#allocation2] sm:$0x3] %vm441, %v440
      $region76: #{_lambda_.11} parent=71 // pred_fallthru
        _
      %v443 = vld [vmem:[#allocation2] sm:$0x3]
      %v444 = vld [vmem:[%s431] sm:$0x3]
      %v445 = vld [vmem:[%s5] sm:$0xff]
      %v446 = vld [vmem:[%s5 + $0x8] sm:$0xff]
      %v447 = vld [vmem:[%s5 + $0x10] sm:$0xff]
      %v448 = vld [vmem:[%s5 + $0x18] sm:$0xff]
      %vm449 = vcmask 261120
      %v451 = vsel %vm449, %v443, 0
      %453 = vmatprep.subr.mxu0 0.0
      %454 = vmatpush1.msra.mxu0 0.0
      %455 = vmatprep.subr.mxu0 0.0
      %456 = vmatpush1.msra.mxu0 0.0
      %457 = vmatprep.subr.mxu0 0.0
      %458 = vmatpush1.msra.mxu0 0.0
      %459 = vmatprep.subr.mxu0 0.0
      %460 = vmatpush1.msra.mxu0 0.0
      %461 = vmatprep.subr.mxu0 0.0
      %462 = vmatpush1.msra.mxu0 0.0
      %463 = vmatprep.subr.mxu0 0.0
      %464 = vmatpush1.msra.mxu0 0.0
      %465 = vmatprep.subr.mxu0 0.0
      %466 = vmatpush1.msra.mxu0 0.0
      %467 = vmatprep.subr.mxu0 0.0
      %468 = vmatpush1.msra.mxu0 0.0
      %469 = vmatprep.subr.mxu0 0.0
      %470 = vmatpush1.msra.mxu0 0.0
      %471 = vmatprep.subr.mxu0 0.0
      %472 = vmatpush1.msra.mxu0 0.0
      %473 = vmatprep.subr.mxu0 0.0
      %474 = vmatpush1.msra.mxu0 0.0
      %475 = vmatprep.subr.mxu0 0.0
      %476 = vmatpush1.msra.mxu0 0.0
      %477 = vmatprep.subr.mxu0 0.0
      %478 = vmatpush1.msra.mxu0 %v448
      %479 = vmatprep.subr.mxu0 0.0
      %480 = vmatpush1.msra.mxu0 %v447
      %481 = vmatprep.subr.mxu0 0.0
      %482 = vmatpush1.msra.mxu0 %v446
      %483 = vmatprep.subr.mxu0 0.0
      %484 = vmatpush1.msra.mxu0 %v445
      %485 = vmatprep.subr.mxu0 0.0
      %486 = vmatpush2.msra.mxu0 0.0
      %487 = vmatprep.subr.mxu0 0.0
      %488 = vmatpush2.msra.mxu0 0.0
      %489 = vmatprep.subr.mxu0 0.0
      %490 = vmatpush2.msra.mxu0 0.0
      %491 = vmatprep.subr.mxu0 0.0
      %492 = vmatpush2.msra.mxu0 0.0
      %493 = vmatprep.subr.mxu0 0.0
      %494 = vmatpush2.msra.mxu0 0.0
      %495 = vmatprep.subr.mxu0 0.0
      %496 = vmatpush2.msra.mxu0 0.0
      %497 = vmatprep.subr.mxu0 0.0
      %498 = vmatpush2.msra.mxu0 0.0
      %499 = vmatprep.subr.mxu0 0.0
      %500 = vmatpush2.msra.mxu0 0.0
      %501 = vmatprep.subr.mxu0 0.0
      %502 = vmatpush2.msra.mxu0 0.0
      %503 = vmatprep.subr.mxu0 0.0
      %504 = vmatpush2.msra.mxu0 0.0
      %505 = vmatprep.subr.mxu0 0.0
      %506 = vmatpush2.msra.mxu0 0.0
      %507 = vmatprep.subr.mxu0 0.0
      %508 = vmatpush2.msra.mxu0 0.0
      %509 = vmatprep.subr.mxu0 0.0
      %510 = vmatpush2.msra.mxu0 0.0
      %511 = vmatprep.subr.mxu0 0.0
      %512 = vmatpush2.msra.mxu0 0.0
      %513 = vmatprep.subr.mxu0 0.0
      %514 = vmatpush2.msra.mxu0 0.0
      %515 = vmatprep.subr.mxu0 0.0
      %516 = vmatpush2.msra.mxu0 0.0
      %517 = vmatprep.mubr.f32.mxu0 0.0
      %518 = vmatmul.mubr.f32.gmra.mxu0 %v451
      %v519 = vpop.f32.mrf.mxu0
      %v520 = vadd.f32 0.0, %v519
      %v521 = vpop.f32.mrf.mxu0
      %522 = vdwg.mxu0
      %v525 = vunpack.c.l.s4 1966171168
      %v526 = vunpack.c.0.s8 %v525
      %v527 = vlaneseq
      %v528 = vshrl.u32 %v527, 7
      %v529 = vsub.s32 %v526, %v528
      %v530 = vrot.slane %v520, %v529
      %v531 = vcombine.high %v530, %v530
      %v533 = vunpack.c.l.s4 1966171168
      %v534 = vunpack.c.0.s8 %v533
      %v535 = vlaneseq
      %v536 = vshrl.u32 %v535, 7
      %v537 = vsub.s32 %v534, %v536
      %v538 = vrot.slane %v530, %v537
      %v540 = vunpack.c.l.s4 1966171168
      %v541 = vunpack.c.0.s8 %v540
      %v542 = vlaneseq
      %v543 = vshrl.u32 %v542, 7
      %v544 = vsub.s32 %v541, %v543
      %v545 = vrot.slane %v531, %v544
      %v546 = vld [vmem:[%s3] sm:$0xff]
      %v547 = vld [vmem:[%s3 + $0x8] sm:$0xff]
      %v548 = vlaneseq
      %v549 = vshrl.u32 %v548, 7
      %v550 = vsub.s32 0, %v549
      %v551 = vrot.slane %v538, %v550
      %v552 = vlaneseq
      %v553 = vshrl.u32 %v552, 7
      %v554 = vsub.s32 0, %v553
      %v555 = vrot.slane %v545, %v554
      %v558 = vadd.f32 %v551, %v546
      %v559 = vadd.f32 %v555, %v547
      %v560 = vtanh.pop %v558
      %v561 = vtanh.pop %v559
      %v562 = vld [vmem:[%s6] sm:$0x1]
      %v564 = vlaneseq
      %v565 = vshrl.u32 %v564, 7
      %v566 = vsub.s32 0, %v565
      %v567 = vrot.slane %v562, %v566
      %v569 = vmul.f32 %v560, %v567
      %v570 = vmul.f32 %v561, %v567
      %v571 = vsel %vm449, %v569, 0.0
      %572 = vadd.xlane.f32.xlu0 %v571
      %v573 = vpop.xlane.xlu0 %572
      %v574 = vsel %vm449, %v570, 0.0
      %575 = vadd.xlane.f32.xlu0 %v574
      %v576 = vpop.xlane.xlu0 %575
      %v577 = vld [vmem:[%s4] sm:$0x3]
      %vm578 = vcmp.eq.f32.partialorder %v577, 0.0
      %v581 = vlaneseq
      %v582 = vand.u32 %v581, 127
      %v583 = vlaneseq
      %v584 = vshrl.u32 %v583, 7
      %v585 = vsub.s32 %v582, %v584
      %v586 = vrot.slane %v573, %v585
      %v587 = vlaneseq
      %v588 = vshrl.u32 %v587, 7
      %v589 = vsub.s32 %v582, %v588
      %v590 = vrot.slane %v576, %v589
      %vm591 = vcmask 1041409
      %v592 = vsel %vm591, %v590, %v586
      %v594 = vsel %vm578, -1e+10, %v592
      %vm595 = vcmask 58368
      %v596 = vsel %vm595, %v594, -inf
      %597 = vmax.xlane.f32.xlu0 %v596
      %v598 = vpop.xlane.xlu0 %597
      %v599 = vsub.f32 %v594, %v598
      %v600 = vmul.f32 %v599, 1.442695
      %v601 = vpow.pop %v600
      %v602 = vsel %vm595, %v601, 0.0
      %603 = vadd.xlane.f32.xlu0 %v602
      %v604 = vpop.xlane.xlu0 %603
      %v605 = vrcp.pop %v604
      %v606 = vmul.f32 %v601, %v605
      %v607 = vlaneseq
      %v608 = vshrl.u32 %v607, 7
      %v609 = vsub.s32 0, %v608
      %v610 = vrot.slane %v606, %v609
      %612 = vbcast.lane.b32.xlu0 %v610, 256
      %v613 = vpop.permute.xlu0 %612
      %v614 = vlaneseq
      %v615 = vshrl.u32 %v614, 7
      %v616 = vsub.s32 1, %v615
      %v617 = vrot.slane %v606, %v616
      %619 = vbcast.lane.b32.xlu0 %v617, 256
      %v620 = vpop.permute.xlu0 %619
      %v621 = vld [vmem:[%s2] sm:$0xff]
      %v622 = vld [vmem:[%s2 + $0x8] sm:$0xff]
      %v623 = vmul.f32 %v613, %v621
      %v624 = vmul.f32 %v620, %v622
      %vm625 = vcmask 523264
      %v626 = vsel %vm625, %v623, 0.0
      %v627 = vrot.slane %v626, 4
      %v628 = vadd.f32 %v626, %v627
      %v629 = vrot.slane %v628, 2
      %v630 = vadd.f32 %v628, %v629
      %v631 = vrot.slane %v630, 1
      %v632 = vadd.f32 %v630, %v631
      %v633 = vsel %vm625, %v624, 0.0
      %v634 = vrot.slane %v633, 4
      %v635 = vadd.f32 %v633, %v634
      %v636 = vrot.slane %v635, 2
      %v637 = vadd.f32 %v635, %v636
      %v638 = vrot.slane %v637, 1
      %v639 = vadd.f32 %v637, %v638
      %v640 = vld [vmem:[%s7] sm:$0xff]
      %v641 = vld [vmem:[%s7 + $0x8] sm:$0xff]
      %v642 = vld [vmem:[%s7 + $0x10] sm:$0xff]
      %v643 = vld [vmem:[%s7 + $0x18] sm:$0xff]
      %v644 = vld [vmem:[%s7 + $0x20] sm:$0xff]
      %v645 = vld [vmem:[%s7 + $0x28] sm:$0xff]
      %v646 = vld [vmem:[%s7 + $0x30] sm:$0xff]
      %v647 = vld [vmem:[%s7 + $0x38] sm:$0xff]
      %v648 = vld [vmem:[%s7 + $0x40] sm:$0xff]
      %v649 = vld [vmem:[%s7 + $0x48] sm:$0xff]
      %v652 = vsel %vm591, %v639, %v632
      %v653 = vsel %vm625, %v652, 0
      %655 = vmatprep.subr.mxu0 0.0
      %656 = vmatpush1.msra.mxu0 0.0
      %657 = vmatprep.subr.mxu0 0.0
      %658 = vmatpush1.msra.mxu0 0.0
      %659 = vmatprep.subr.mxu0 0.0
      %660 = vmatpush1.msra.mxu0 0.0
      %661 = vmatprep.subr.mxu0 0.0
      %662 = vmatpush1.msra.mxu0 0.0
      %663 = vmatprep.subr.mxu0 0.0
      %664 = vmatpush1.msra.mxu0 0.0
      %665 = vmatprep.subr.mxu0 0.0
      %666 = vmatpush1.msra.mxu0 0.0
      %667 = vmatprep.subr.mxu0 0.0
      %668 = vmatpush1.msra.mxu0 0.0
      %669 = vmatprep.subr.mxu0 0.0
      %670 = vmatpush1.msra.mxu0 0.0
      %671 = vmatprep.subr.mxu0 0.0
      %672 = vmatpush1.msra.mxu0 %v649
      %673 = vmatprep.subr.mxu0 0.0
      %674 = vmatpush1.msra.mxu0 %v648
      %675 = vmatprep.subr.mxu0 0.0
      %676 = vmatpush1.msra.mxu0 %v647
      %677 = vmatprep.subr.mxu0 0.0
      %678 = vmatpush1.msra.mxu0 %v646
      %679 = vmatprep.subr.mxu0 0.0
      %680 = vmatpush1.msra.mxu0 %v645
      %681 = vmatprep.subr.mxu0 0.0
      %682 = vmatpush1.msra.mxu0 %v644
      %683 = vmatprep.subr.mxu0 0.0
      %684 = vmatpush1.msra.mxu0 %v643
      %685 = vmatprep.subr.mxu0 0.0
      %686 = vmatpush1.msra.mxu0 %v642
      %687 = vmatprep.subr.mxu0 0.0
      %688 = vmatpush2.msra.mxu0 0.0
      %689 = vmatprep.subr.mxu0 0.0
      %690 = vmatpush2.msra.mxu0 0.0
      %691 = vmatprep.subr.mxu0 0.0
      %692 = vmatpush2.msra.mxu0 0.0
      %693 = vmatprep.subr.mxu0 0.0
      %694 = vmatpush2.msra.mxu0 0.0
      %695 = vmatprep.subr.mxu0 0.0
      %696 = vmatpush2.msra.mxu0 0.0
      %697 = vmatprep.subr.mxu0 0.0
      %698 = vmatpush2.msra.mxu0 0.0
      %699 = vmatprep.subr.mxu0 0.0
      %700 = vmatpush2.msra.mxu0 0.0
      %701 = vmatprep.subr.mxu0 0.0
      %702 = vmatpush2.msra.mxu0 0.0
      %703 = vmatprep.subr.mxu0 0.0
      %704 = vmatpush2.msra.mxu0 0.0
      %705 = vmatprep.subr.mxu0 0.0
      %706 = vmatpush2.msra.mxu0 0.0
      %707 = vmatprep.subr.mxu0 0.0
      %708 = vmatpush2.msra.mxu0 0.0
      %709 = vmatprep.subr.mxu0 0.0
      %710 = vmatpush2.msra.mxu0 0.0
      %711 = vmatprep.subr.mxu0 0.0
      %712 = vmatpush2.msra.mxu0 0.0
      %713 = vmatprep.subr.mxu0 0.0
      %714 = vmatpush2.msra.mxu0 0.0
      %715 = vmatprep.subr.mxu0 0.0
      %716 = vmatpush2.msra.mxu0 0.0
      %717 = vmatprep.subr.mxu0 0.0
      %718 = vmatpush2.msra.mxu0 0.0
      %719 = vmatprep.mubr.f32.mxu0 0.0
      %720 = vmatmul.mubr.f32.gmra.mxu0 %v653
      %v721 = vpop.f32.mrf.mxu0
      %v722 = vadd.f32 0.0, %v721
      %v723 = vpop.f32.mrf.mxu0
      %724 = vdwg.mxu0
      %vm725 = vcmask 130048
      %v727 = vsel %vm725, %v444, 0
      %729 = vmatprep.subr.mxu0 0.0
      %730 = vmatpush1.msra.mxu0 0.0
      %731 = vmatprep.subr.mxu0 0.0
      %732 = vmatpush1.msra.mxu0 0.0
      %733 = vmatprep.subr.mxu0 0.0
      %734 = vmatpush1.msra.mxu0 0.0
      %735 = vmatprep.subr.mxu0 0.0
      %736 = vmatpush1.msra.mxu0 0.0
      %737 = vmatprep.subr.mxu0 0.0
      %738 = vmatpush1.msra.mxu0 0.0
      %739 = vmatprep.subr.mxu0 0.0
      %740 = vmatpush1.msra.mxu0 0.0
      %741 = vmatprep.subr.mxu0 0.0
      %742 = vmatpush1.msra.mxu0 0.0
      %743 = vmatprep.subr.mxu0 0.0
      %744 = vmatpush1.msra.mxu0 0.0
      %745 = vmatprep.subr.mxu0 0.0
      %746 = vmatpush1.msra.mxu0 0.0
      %747 = vmatprep.subr.mxu0 0.0
      %748 = vmatpush1.msra.mxu0 0.0
      %749 = vmatprep.subr.mxu0 0.0
      %750 = vmatpush1.msra.mxu0 0.0
      %751 = vmatprep.subr.mxu0 0.0
      %752 = vmatpush1.msra.mxu0 0.0
      %753 = vmatprep.subr.mxu0 0.0
      %754 = vmatpush1.msra.mxu0 0.0
      %755 = vmatprep.subr.mxu0 0.0
      %756 = vmatpush1.msra.mxu0 0.0
      %757 = vmatprep.subr.mxu0 0.0
      %758 = vmatpush1.msra.mxu0 %v641
      %759 = vmatprep.subr.mxu0 0.0
      %760 = vmatpush1.msra.mxu0 %v640
      %761 = vmatprep.subr.mxu0 0.0
      %762 = vmatpush2.msra.mxu0 0.0
      %763 = vmatprep.subr.mxu0 0.0
      %764 = vmatpush2.msra.mxu0 0.0
      %765 = vmatprep.subr.mxu0 0.0
      %766 = vmatpush2.msra.mxu0 0.0
      %767 = vmatprep.subr.mxu0 0.0
      %768 = vmatpush2.msra.mxu0 0.0
      %769 = vmatprep.subr.mxu0 0.0
      %770 = vmatpush2.msra.mxu0 0.0
      %771 = vmatprep.subr.mxu0 0.0
      %772 = vmatpush2.msra.mxu0 0.0
      %773 = vmatprep.subr.mxu0 0.0
      %774 = vmatpush2.msra.mxu0 0.0
      %775 = vmatprep.subr.mxu0 0.0
      %776 = vmatpush2.msra.mxu0 0.0
      %777 = vmatprep.subr.mxu0 0.0
      %778 = vmatpush2.msra.mxu0 0.0
      %779 = vmatprep.subr.mxu0 0.0
      %780 = vmatpush2.msra.mxu0 0.0
      %781 = vmatprep.subr.mxu0 0.0
      %782 = vmatpush2.msra.mxu0 0.0
      %783 = vmatprep.subr.mxu0 0.0
      %784 = vmatpush2.msra.mxu0 0.0
      %785 = vmatprep.subr.mxu0 0.0
      %786 = vmatpush2.msra.mxu0 0.0
      %787 = vmatprep.subr.mxu0 0.0
      %788 = vmatpush2.msra.mxu0 0.0
      %789 = vmatprep.subr.mxu0 0.0
      %790 = vmatpush2.msra.mxu0 0.0
      %791 = vmatprep.subr.mxu0 0.0
      %792 = vmatpush2.msra.mxu0 0.0
      %793 = vmatprep.mubr.f32.mxu0 0.0
      %794 = vmatmul.mubr.f32.gmra.mxu0 %v727
      %v795 = vpop.f32.mrf.mxu0
      %v796 = vadd.f32 %v722, %v795
      %v797 = vpop.f32.mrf.mxu0
      %798 = vdwg.mxu0
      %v799 = vld [vmem:[%s9] sm:$0x1]
      %v801 = vlaneseq
      %v802 = vshrl.u32 %v801, 7
      %v803 = vsub.s32 0, %v802
      %v804 = vrot.slane %v799, %v803
      %v806 = vadd.f32 %v796, %v804
      %v807 = vld [vmem:[%s8] sm:$0xff]
      %v808 = vld [vmem:[%s8 + $0x8] sm:$0xff]
      %v809 = vld [vmem:[%s8 + $0x10] sm:$0xff]
      %v810 = vld [vmem:[%s8 + $0x18] sm:$0xff]
      %v811 = vld [vmem:[%s10] sm:$0x1]
      %v813 = vlaneseq
      %v814 = vshrl.u32 %v813, 7
      %v815 = vsub.s32 0, %v814
      %v816 = vrot.slane %v811, %v815
      %818 = vmatprep.subr.mxu0 0.0
      %819 = vmatpush1.msra.mxu0 0.0
      %820 = vmatprep.subr.mxu0 0.0
      %821 = vmatpush1.msra.mxu0 0.0
      %822 = vmatprep.subr.mxu0 0.0
      %823 = vmatpush1.msra.mxu0 0.0
      %824 = vmatprep.subr.mxu0 0.0
      %825 = vmatpush1.msra.mxu0 0.0
      %826 = vmatprep.subr.mxu0 0.0
      %827 = vmatpush1.msra.mxu0 0.0
      %828 = vmatprep.subr.mxu0 0.0
      %829 = vmatpush1.msra.mxu0 0.0
      %830 = vmatprep.subr.mxu0 0.0
      %831 = vmatpush1.msra.mxu0 0.0
      %832 = vmatprep.subr.mxu0 0.0
      %833 = vmatpush1.msra.mxu0 0.0
      %834 = vmatprep.subr.mxu0 0.0
      %835 = vmatpush1.msra.mxu0 0.0
      %836 = vmatprep.subr.mxu0 0.0
      %837 = vmatpush1.msra.mxu0 0.0
      %838 = vmatprep.subr.mxu0 0.0
      %839 = vmatpush1.msra.mxu0 0.0
      %840 = vmatprep.subr.mxu0 0.0
      %841 = vmatpush1.msra.mxu0 0.0
      %842 = vmatprep.subr.mxu0 0.0
      %843 = vmatpush1.msra.mxu0 %v810
      %844 = vmatprep.subr.mxu0 0.0
      %845 = vmatpush1.msra.mxu0 %v809
      %846 = vmatprep.subr.mxu0 0.0
      %847 = vmatpush1.msra.mxu0 %v808
      %848 = vmatprep.subr.mxu0 0.0
      %849 = vmatpush1.msra.mxu0 %v807
      %850 = vmatprep.subr.mxu0 0.0
      %851 = vmatpush2.msra.mxu0 0.0
      %852 = vmatprep.subr.mxu0 0.0
      %853 = vmatpush2.msra.mxu0 0.0
      %854 = vmatprep.subr.mxu0 0.0
      %855 = vmatpush2.msra.mxu0 0.0
      %856 = vmatprep.subr.mxu0 0.0
      %857 = vmatpush2.msra.mxu0 0.0
      %858 = vmatprep.subr.mxu0 0.0
      %859 = vmatpush2.msra.mxu0 0.0
      %860 = vmatprep.subr.mxu0 0.0
      %861 = vmatpush2.msra.mxu0 0.0
      %862 = vmatprep.subr.mxu0 0.0
      %863 = vmatpush2.msra.mxu0 0.0
      %864 = vmatprep.subr.mxu0 0.0
      %865 = vmatpush2.msra.mxu0 0.0
      %866 = vmatprep.subr.mxu0 0.0
      %867 = vmatpush2.msra.mxu0 0.0
      %868 = vmatprep.subr.mxu0 0.0
      %869 = vmatpush2.msra.mxu0 0.0
      %870 = vmatprep.subr.mxu0 0.0
      %871 = vmatpush2.msra.mxu0 0.0
      %872 = vmatprep.subr.mxu0 0.0
      %873 = vmatpush2.msra.mxu0 0.0
      %874 = vmatprep.subr.mxu0 0.0
      %875 = vmatpush2.msra.mxu0 0.0
      %876 = vmatprep.subr.mxu0 0.0
      %877 = vmatpush2.msra.mxu0 0.0
      %878 = vmatprep.subr.mxu0 0.0
      %879 = vmatpush2.msra.mxu0 0.0
      %880 = vmatprep.subr.mxu0 0.0
      %881 = vmatpush2.msra.mxu0 0.0
      %882 = vmatprep.mubr.f32.mxu0 0.0
      %883 = vmatmul.mubr.f32.gmra.mxu0 %v451
      %v884 = vpop.f32.mrf.mxu0
      %v885 = vadd.f32 %v816, %v884
      %v886 = vpop.f32.mrf.mxu0
      %887 = vdwg.mxu0
      %v888 = vadd.f32 %v806, %v885
      %v889 = vxor.u32 %v888, 2147483648
      %v890 = vmul.f32 %v889, 1.442695
      %v891 = vpow.pop %v890
      %v892 = vadd.f32 %v891, 1.0
      %v893 = vrcp.pop %v892
      %v894 = vmul.f32 1.0, %v893
      %896 = vrot.lane.b32.xlu0 %v885, 64
      %v897 = vpop.permute.xlu0 %896
      %v899 = vmul.f32 %v894, %v897
      %901 = vrot.lane.b32.xlu0 %v899, 64
      %v902 = vpop.permute.xlu0 %901
      %v904 = vadd.f32 %v806, %v902
      %v905 = vtanh.pop %v904
      %v906 = vsub.f32 1.0, %v894
      %908 = vrot.lane.b32.xlu0 %v905, 96
      %v909 = vpop.permute.xlu0 %908
      %v911 = vmul.f32 %v906, %v909
      %912 = vrot.lane.b32.xlu0 %v443, 32
      %v913 = vpop.permute.xlu0 %912
      %v915 = vmul.f32 %v894, %v913
      %v916 = vadd.f32 %v911, %v915
      %918 = vrot.lane.b32.xlu0 %v916, 96
      %v919 = vpop.permute.xlu0 %918
      %vm921 = vcmask 254976
      %922 = vst.msk [vmem:[#allocation2] sm:$0x3] %vm921, %v919
      %v923 = vld [vmem:[%s11] sm:$0xff]
      %v924 = vld [vmem:[%s11 + $0x8] sm:$0xff]
      %v925 = vld [vmem:[%s11 + $0x10] sm:$0xff]
      %v926 = vld [vmem:[%s11 + $0x18] sm:$0xff]
      %v927 = vld [vmem:[%s11 + $0x20] sm:$0xff]
      %v928 = vld [vmem:[%s11 + $0x28] sm:$0xff]
      %929 = vmatprep.subr.mxu0 0.0
      %930 = vmatpush1.msra.mxu0 0.0
      %931 = vmatprep.subr.mxu0 0.0
      %932 = vmatpush1.msra.mxu0 0.0
      %933 = vmatprep.subr.mxu0 0.0
      %934 = vmatpush1.msra.mxu0 0.0
      %935 = vmatprep.subr.mxu0 0.0
      %936 = vmatpush1.msra.mxu0 0.0
      %937 = vmatprep.subr.mxu0 0.0
      %938 = vmatpush1.msra.mxu0 0.0
      %939 = vmatprep.subr.mxu0 0.0
      %940 = vmatpush1.msra.mxu0 0.0
      %941 = vmatprep.subr.mxu0 0.0
      %942 = vmatpush1.msra.mxu0 0.0
      %943 = vmatprep.subr.mxu0 0.0
      %944 = vmatpush1.msra.mxu0 0.0
      %945 = vmatprep.subr.mxu0 0.0
      %946 = vmatpush1.msra.mxu0 0.0
      %947 = vmatprep.subr.mxu0 0.0
      %948 = vmatpush1.msra.mxu0 0.0
      %949 = vmatprep.subr.mxu0 0.0
      %950 = vmatpush1.msra.mxu0 0.0
      %951 = vmatprep.subr.mxu0 0.0
      %952 = vmatpush1.msra.mxu0 0.0
      %953 = vmatprep.subr.mxu0 0.0
      %954 = vmatpush1.msra.mxu0 0.0
      %955 = vmatprep.subr.mxu0 0.0
      %956 = vmatpush1.msra.mxu0 0.0
      %957 = vmatprep.subr.mxu0 0.0
      %958 = vmatpush1.msra.mxu0 %v928
      %959 = vmatprep.subr.mxu0 0.0
      %960 = vmatpush1.msra.mxu0 %v927
      %961 = vmatprep.subr.mxu0 0.0
      %962 = vmatpush2.msra.mxu0 0.0
      %963 = vmatprep.subr.mxu0 0.0
      %964 = vmatpush2.msra.mxu0 0.0
      %965 = vmatprep.subr.mxu0 0.0
      %966 = vmatpush2.msra.mxu0 0.0
      %967 = vmatprep.subr.mxu0 0.0
      %968 = vmatpush2.msra.mxu0 0.0
      %969 = vmatprep.subr.mxu0 0.0
      %970 = vmatpush2.msra.mxu0 0.0
      %971 = vmatprep.subr.mxu0 0.0
      %972 = vmatpush2.msra.mxu0 0.0
      %973 = vmatprep.subr.mxu0 0.0
      %974 = vmatpush2.msra.mxu0 0.0
      %975 = vmatprep.subr.mxu0 0.0
      %976 = vmatpush2.msra.mxu0 0.0
      %977 = vmatprep.subr.mxu0 0.0
      %978 = vmatpush2.msra.mxu0 0.0
      %979 = vmatprep.subr.mxu0 0.0
      %980 = vmatpush2.msra.mxu0 0.0
      %981 = vmatprep.subr.mxu0 0.0
      %982 = vmatpush2.msra.mxu0 0.0
      %983 = vmatprep.subr.mxu0 0.0
      %984 = vmatpush2.msra.mxu0 0.0
      %985 = vmatprep.subr.mxu0 0.0
      %986 = vmatpush2.msra.mxu0 0.0
      %987 = vmatprep.subr.mxu0 0.0
      %988 = vmatpush2.msra.mxu0 0.0
      %989 = vmatprep.subr.mxu0 0.0
      %990 = vmatpush2.msra.mxu0 0.0
      %991 = vmatprep.subr.mxu0 0.0
      %992 = vmatpush2.msra.mxu0 0.0
      %993 = vmatprep.mubr.f32.mxu0 0.0
      %994 = vmatmul.mubr.f32.gmra.mxu0 %v727
      %v995 = vpop.f32.mrf.mxu0
      %v996 = vadd.f32 0.0, %v995
      %v997 = vpop.f32.mrf.mxu0
      %998 = vdwg.mxu0
      %v999 = vsel %vm449, %v919, 0
      %1001 = vmatprep.subr.mxu0 0.0
      %1002 = vmatpush1.msra.mxu0 0.0
      %1003 = vmatprep.subr.mxu0 0.0
      %1004 = vmatpush1.msra.mxu0 0.0
      %1005 = vmatprep.subr.mxu0 0.0
      %1006 = vmatpush1.msra.mxu0 0.0
      %1007 = vmatprep.subr.mxu0 0.0
      %1008 = vmatpush1.msra.mxu0 0.0
      %1009 = vmatprep.subr.mxu0 0.0
      %1010 = vmatpush1.msra.mxu0 0.0
      %1011 = vmatprep.subr.mxu0 0.0
      %1012 = vmatpush1.msra.mxu0 0.0
      %1013 = vmatprep.subr.mxu0 0.0
      %1014 = vmatpush1.msra.mxu0 0.0
      %1015 = vmatprep.subr.mxu0 0.0
      %1016 = vmatpush1.msra.mxu0 0.0
      %1017 = vmatprep.subr.mxu0 0.0
      %1018 = vmatpush1.msra.mxu0 0.0
      %1019 = vmatprep.subr.mxu0 0.0
      %1020 = vmatpush1.msra.mxu0 0.0
      %1021 = vmatprep.subr.mxu0 0.0
      %1022 = vmatpush1.msra.mxu0 0.0
      %1023 = vmatprep.subr.mxu0 0.0
      %1024 = vmatpush1.msra.mxu0 0.0
      %1025 = vmatprep.subr.mxu0 0.0
      %1026 = vmatpush1.msra.mxu0 %v926
      %1027 = vmatprep.subr.mxu0 0.0
      %1028 = vmatpush1.msra.mxu0 %v925
      %1029 = vmatprep.subr.mxu0 0.0
      %1030 = vmatpush1.msra.mxu0 %v924
      %1031 = vmatprep.subr.mxu0 0.0
      %1032 = vmatpush1.msra.mxu0 %v923
      %1033 = vmatprep.subr.mxu0 0.0
      %1034 = vmatpush2.msra.mxu0 0.0
      %1035 = vmatprep.subr.mxu0 0.0
      %1036 = vmatpush2.msra.mxu0 0.0
      %1037 = vmatprep.subr.mxu0 0.0
      %1038 = vmatpush2.msra.mxu0 0.0
      %1039 = vmatprep.subr.mxu0 0.0
      %1040 = vmatpush2.msra.mxu0 0.0
      %1041 = vmatprep.subr.mxu0 0.0
      %1042 = vmatpush2.msra.mxu0 0.0
      %1043 = vmatprep.subr.mxu0 0.0
      %1044 = vmatpush2.msra.mxu0 0.0
      %1045 = vmatprep.subr.mxu0 0.0
      %1046 = vmatpush2.msra.mxu0 0.0
      %1047 = vmatprep.subr.mxu0 0.0
      %1048 = vmatpush2.msra.mxu0 0.0
      %1049 = vmatprep.subr.mxu0 0.0
      %1050 = vmatpush2.msra.mxu0 0.0
      %1051 = vmatprep.subr.mxu0 0.0
      %1052 = vmatpush2.msra.mxu0 0.0
      %1053 = vmatprep.subr.mxu0 0.0
      %1054 = vmatpush2.msra.mxu0 0.0
      %1055 = vmatprep.subr.mxu0 0.0
      %1056 = vmatpush2.msra.mxu0 0.0
      %1057 = vmatprep.subr.mxu0 0.0
      %1058 = vmatpush2.msra.mxu0 0.0
      %1059 = vmatprep.subr.mxu0 0.0
      %1060 = vmatpush2.msra.mxu0 0.0
      %1061 = vmatprep.subr.mxu0 0.0
      %1062 = vmatpush2.msra.mxu0 0.0
      %1063 = vmatprep.subr.mxu0 0.0
      %1064 = vmatpush2.msra.mxu0 0.0
      %1065 = vmatprep.mubr.f32.mxu0 0.0
      %1066 = vmatmul.mubr.f32.gmra.mxu0 %v999
      %v1067 = vpop.f32.mrf.mxu0
      %v1068 = vadd.f32 %v996, %v1067
      %v1069 = vpop.f32.mrf.mxu0
      %1070 = vdwg.mxu0
      %v1071 = vld [vmem:[%s11 + $0x30] sm:$0xff]
      %v1072 = vld [vmem:[%s11 + $0x38] sm:$0xff]
      %v1073 = vld [vmem:[%s11 + $0x40] sm:$0xff]
      %v1074 = vld [vmem:[%s11 + $0x48] sm:$0xff]
      %v1075 = vld [vmem:[%s11 + $0x50] sm:$0xff]
      %v1076 = vld [vmem:[%s11 + $0x58] sm:$0xff]
      %v1077 = vld [vmem:[%s11 + $0x60] sm:$0xff]
      %v1078 = vld [vmem:[%s11 + $0x68] sm:$0xff]
      %1079 = vmatprep.subr.mxu0 0.0
      %1080 = vmatpush1.msra.mxu0 0.0
      %1081 = vmatprep.subr.mxu0 0.0
      %1082 = vmatpush1.msra.mxu0 0.0
      %1083 = vmatprep.subr.mxu0 0.0
      %1084 = vmatpush1.msra.mxu0 0.0
      %1085 = vmatprep.subr.mxu0 0.0
      %1086 = vmatpush1.msra.mxu0 0.0
      %1087 = vmatprep.subr.mxu0 0.0
      %1088 = vmatpush1.msra.mxu0 0.0
      %1089 = vmatprep.subr.mxu0 0.0
      %1090 = vmatpush1.msra.mxu0 0.0
      %1091 = vmatprep.subr.mxu0 0.0
      %1092 = vmatpush1.msra.mxu0 0.0
      %1093 = vmatprep.subr.mxu0 0.0
      %1094 = vmatpush1.msra.mxu0 0.0
      %1095 = vmatprep.subr.mxu0 0.0
      %1096 = vmatpush1.msra.mxu0 %v1078
      %1097 = vmatprep.subr.mxu0 0.0
      %1098 = vmatpush1.msra.mxu0 %v1077
      %1099 = vmatprep.subr.mxu0 0.0
      %1100 = vmatpush1.msra.mxu0 %v1076
      %1101 = vmatprep.subr.mxu0 0.0
      %1102 = vmatpush1.msra.mxu0 %v1075
      %1103 = vmatprep.subr.mxu0 0.0
      %1104 = vmatpush1.msra.mxu0 %v1074
      %1105 = vmatprep.subr.mxu0 0.0
      %1106 = vmatpush1.msra.mxu0 %v1073
      %1107 = vmatprep.subr.mxu0 0.0
      %1108 = vmatpush1.msra.mxu0 %v1072
      %1109 = vmatprep.subr.mxu0 0.0
      %1110 = vmatpush1.msra.mxu0 %v1071
      %1111 = vmatprep.subr.mxu0 0.0
      %1112 = vmatpush2.msra.mxu0 0.0
      %1113 = vmatprep.subr.mxu0 0.0
      %1114 = vmatpush2.msra.mxu0 0.0
      %1115 = vmatprep.subr.mxu0 0.0
      %1116 = vmatpush2.msra.mxu0 0.0
      %1117 = vmatprep.subr.mxu0 0.0
      %1118 = vmatpush2.msra.mxu0 0.0
      %1119 = vmatprep.subr.mxu0 0.0
      %1120 = vmatpush2.msra.mxu0 0.0
      %1121 = vmatprep.subr.mxu0 0.0
      %1122 = vmatpush2.msra.mxu0 0.0
      %1123 = vmatprep.subr.mxu0 0.0
      %1124 = vmatpush2.msra.mxu0 0.0
      %1125 = vmatprep.subr.mxu0 0.0
      %1126 = vmatpush2.msra.mxu0 0.0
      %1127 = vmatprep.subr.mxu0 0.0
      %1128 = vmatpush2.msra.mxu0 0.0
      %1129 = vmatprep.subr.mxu0 0.0
      %1130 = vmatpush2.msra.mxu0 0.0
      %1131 = vmatprep.subr.mxu0 0.0
      %1132 = vmatpush2.msra.mxu0 0.0
      %1133 = vmatprep.subr.mxu0 0.0
      %1134 = vmatpush2.msra.mxu0 0.0
      %1135 = vmatprep.subr.mxu0 0.0
      %1136 = vmatpush2.msra.mxu0 0.0
      %1137 = vmatprep.subr.mxu0 0.0
      %1138 = vmatpush2.msra.mxu0 0.0
      %1139 = vmatprep.subr.mxu0 0.0
      %1140 = vmatpush2.msra.mxu0 0.0
      %1141 = vmatprep.subr.mxu0 0.0
      %1142 = vmatpush2.msra.mxu0 0.0
      %1143 = vmatprep.mubr.f32.mxu0 0.0
      %1144 = vmatmul.mubr.f32.gmra.mxu0 %v653
      %v1145 = vpop.f32.mrf.mxu0
      %v1146 = vadd.f32 0.0, %v1145
      %v1147 = vpop.f32.mrf.mxu0
      %1148 = vdwg.mxu0
      %v1149 = vadd.f32 %v1068, %v1146
      %v1150 = vld [vmem:[%s12] sm:$0x1]
      %v1152 = vlaneseq
      %v1153 = vshrl.u32 %v1152, 7
      %v1154 = vsub.s32 0, %v1153
      %v1155 = vrot.slane %v1150, %v1154
      %v1157 = vadd.f32 %v1149, %v1155
      %vm1158 = vcmask 402432
      %1159 = vst.msk [vmem:[%s435] sm:$0x3] %vm1158, %v1157
      %p1160 = scmp.lt.s32.totalorder %s24, 4
      %s1161 = scalar_select %p1160, %s24, 4
      %s1162 = smul.addr %s1161, 2
      %s1163 = scalar_lea.vmem %s13, %s1162
      // Predicated region
      $region77: #{_lambda_.11} parent=71 // pred_check
        %p1164 = pneg %p320
      $region78: #{_lambda_.11} parent=71 // pred_check_branch
        %1166 = sbr.rel (%p1164) target = $region80
      $region79: #{_lambda_.11} parent=71 // pred_region
        _
      $region80: #{_lambda_.11} parent=71 // pred_fallthru
        _
    $region72: #{_lambda_.11} parent=5 // pred_fallthru
      _
    %p1167 = scmp.le.s32.totalorder 2, %s19
    // Predicated region
    $region81: #{_lambda_.11} parent=5 // pred_check
      %p1168 = pneg %p1167
    $region82: #{_lambda_.11} parent=5 // pred_check_branch
      %1170 = sbr.rel (%p1168) target = $region84
    $region83: #{_lambda_.11} parent=5 // pred_region
      %s1171 = ssub.s32 %s19, 2
      // Predicated region
      $region85: #{_lambda_.11} parent=83 // pred_check
        %p1172 = pneg %p326
      $region86: #{_lambda_.11} parent=83 // pred_check_branch
        %1174 = sbr.rel (%p1172) target = $region88
      $region87: #{_lambda_.11} parent=83 // pred_region
        %p1175 = scmp.lt.s32.totalorder %s25, 4
        %s1176 = scalar_select %p1175, %s25, 4
        %s1177 = smul.addr %s1176, 2
        %s1178 = scalar_lea.vmem %s13, %s1177
      $region88: #{_lambda_.11} parent=83 // pred_fallthru
        _
    $region84: #{_lambda_.11} parent=5 // pred_fallthru
      _
  $region6: #{_lambda_.11} parent=0 // loop_footer
    %s23 = sadd.s32 1, %s19
  $region7: #{_lambda_.11} parent=0 // loop_footer_branch
    %18 = sbr.rel target = $region3
  $region8: #{_lambda_.11} parent=0 // loop_exit
    _

</llo_original>
